<compile_context>
chip_gen: v5e
topology: v5e:2x2
jax: 0.10.0
libtpu: 0.0.40
codegen_flags: <defaults>
</compile_context>

<pallas_src>
import math

import jax
import jax.numpy as jnp
from jax import lax
from jax.experimental import pallas as pl
from jax.experimental.pallas import tpu as pltpu

LPAD = 8  # sublane-aligned zero block on each side of W (>= 1 halo column)


def _gelu_tanh(x):
    # tanh approximation of GELU (single EUP tanh per element).
    c = math.sqrt(2.0 / math.pi)
    return 0.5 * x * (1.0 + jnp.tanh(c * (x + 0.044715 * x * x * x)))


def _lpi_kernel(x_ref, p_ref, out_ref, xp_ref):
    # x_ref   : (H, W, C)            input image block, channel-last
    # p_ref   : (22, C)              rows 0..8  = conv1 taps (ky*3+kx)
    #                                rows 9..17 = conv2 taps
    #                                row 18 = conv1 bias, 19 = conv2 bias
    #                                row 20 = bn scale,  21 = bn shift
    # out_ref : (H, W, C)
    # xp_ref  : (H+2, LPAD+W+LPAD, C) zero-halo padded scratch (VMEM), shared
    #                                by both convs.
    H, W, C = out_ref.shape
    SW = xp_ref.shape[1]

    # Load the whole parameter slab once; slice the value below.
    p = p_ref[...].astype(jnp.float32)                              # (22, C)

    # Zero the halo regions with aligned, unmasked full-block stores.
    # (Interior is fully overwritten below; halo stays zero across both convs.)
    xp_ref[:, 0:LPAD, :] = jnp.zeros((H + 2, LPAD, C), jnp.float32)
    xp_ref[:, LPAD + W:SW, :] = jnp.zeros((H + 2, SW - LPAD - W, C), jnp.float32)
    xp_ref[0:1, :, :] = jnp.zeros((1, SW, C), jnp.float32)
    xp_ref[H + 1:H + 2, :, :] = jnp.zeros((1, SW, C), jnp.float32)

    def dwconv(tap_base):
        # Depthwise 3x3 conv from the padded scratch.  Width shift hoisted:
        # one (H+2, W, C) slab per dx (only dx=0,2 are sublane-misaligned);
        # the dy shifts are leading-axis value slices (free).
        acc = None
        for dx in range(3):
            slab = xp_ref[:, LPAD - 1 + dx:LPAD - 1 + dx + W, :]    # (H+2, W, C)
            for dy in range(3):
                k = tap_base + dy * 3 + dx
                term = slab[dy:dy + H] * p[k:k + 1, :]
                acc = term if acc is None else acc + term
        return acc

    # ---- depthwise 3x3 conv #1 (+ bias) ----
    xp_ref[1:H + 1, LPAD:LPAD + W, :] = x_ref[...].astype(jnp.float32)
    y = dwconv(0) + p[18:19, :]

    # ---- GELU (tanh approx, EUP) + BatchNorm (folded per-channel affine) ----
    y = _gelu_tanh(y) * p[20:21, :] + p[21:22, :]

    # ---- depthwise 3x3 conv #2 (+ bias), reusing the same scratch ----
    xp_ref[1:H + 1, LPAD:LPAD + W, :] = y
    out_ref[...] = (dwconv(9) + p[19:20, :]).astype(out_ref.dtype)


def lpi_forward(x, H, W, conv1_w, conv1_b, bn_gamma, bn_beta, bn_mean, bn_var,
                conv2_w, conv2_b, *, bn_eps=1e-5):
    """LPI forward.  x: (B, N, C) with N == H*W.
    conv*_w: PyTorch depthwise layout (C, 1, 3, 3); conv*_b, bn_*: (C,)."""
    B, N, C = x.shape
    assert N == H * W, (N, H, W)

    # (B, N, C) row-major over (H, W) is exactly NHWC -> free reshape only.
    x4 = x.reshape(B, H, W, C)

    # Pack all per-channel parameters into one small (22, C) slab.
    w1t = conv1_w.reshape(C, 9).T.astype(jnp.float32)               # (9, C)
    w2t = conv2_w.reshape(C, 9).T.astype(jnp.float32)               # (9, C)
    bn_scale = (bn_gamma / jnp.sqrt(bn_var + bn_eps)).astype(jnp.float32)
    bn_shift = (bn_beta.astype(jnp.float32)
                - bn_mean.astype(jnp.float32) * bn_scale)
    vecs = jnp.stack([conv1_b.astype(jnp.float32),
                      conv2_b.astype(jnp.float32),
                      bn_scale, bn_shift], axis=0)                  # (4, C)
    params = jnp.concatenate([w1t, w2t, vecs], axis=0)              # (22, C)

    SW = LPAD + W + LPAD
    itemsize = x.dtype.itemsize
    cost = pl.CostEstimate(
        flops=int(50 * B * H * W * C),                   # 2x(9 MAC) + gelu/bn
        transcendentals=int(B * H * W * C),              # one tanh / element
        bytes_accessed=int((2 * B * H * W * C + 22 * C) * itemsize))

    out4 = pl.pallas_call(
        _lpi_kernel,
        out_shape=jax.ShapeDtypeStruct((B, H, W, C), x.dtype),
        grid_spec=pltpu.PrefetchScalarGridSpec(
            num_scalar_prefetch=0,
            grid=(B,),
            in_specs=[
                pl.BlockSpec((None, H, W, C), lambda b: (b, 0, 0, 0)),
                pl.BlockSpec((22, C), lambda b: (0, 0)),
            ],
            out_specs=pl.BlockSpec((None, H, W, C), lambda b: (b, 0, 0, 0)),
            scratch_shapes=[
                pltpu.VMEM((H + 2, SW, C), jnp.float32),
            ],
        ),
        compiler_params=pltpu.CompilerParams(
            dimension_semantics=("parallel",)),
        cost_estimate=cost,
    )(x4, params)

    return out4.reshape(B, N, C)


def _reference(x, H, W, conv1_w, conv1_b, bn_gamma, bn_beta, bn_mean, bn_var,
               conv2_w, conv2_b, *, bn_eps=1e-5):
    """Pure-JAX transcription of the PyTorch forward (inference-mode BN)."""
    B, N, C = x.shape
    xi = jnp.transpose(x, (0, 2, 1)).reshape(B, C, H, W)

    def dw3x3(t, w, b):
        y = lax.conv_general_dilated(
            t, w.astype(jnp.float32), window_strides=(1, 1),
            padding=((1, 1), (1, 1)),
            dimension_numbers=("NCHW", "OIHW", "NCHW"),
            feature_group_count=C, precision=lax.Precision.HIGHEST)
        return y + b[None, :, None, None]

    y = dw3x3(xi, conv1_w, conv1_b)
    y = _gelu_tanh(y)
    scale = bn_gamma / jnp.sqrt(bn_var + bn_eps)
    y = (y - bn_mean[None, :, None, None]) * scale[None, :, None, None] \
        + bn_beta[None, :, None, None]
    y = dw3x3(y, conv2_w, conv2_b)
    return jnp.transpose(y.reshape(B, C, N), (0, 2, 1))


if __name__ == "__main__":
    B, H, W, C = 2, 16, 16, 128          # dim = 128 (lane-width friendly)
    N = H * W

    key = jax.random.PRNGKey(0)
    ks = jax.random.split(key, 9)
    x = jax.random.normal(ks[0], (B, N, C), jnp.float32)
    conv1_w = jax.random.normal(ks[1], (C, 1, 3, 3), jnp.float32) * 0.2
    conv1_b = jax.random.normal(ks[2], (C,), jnp.float32) * 0.1
    conv2_w = jax.random.normal(ks[3], (C, 1, 3, 3), jnp.float32) * 0.2
    conv2_b = jax.random.normal(ks[4], (C,), jnp.float32) * 0.1
    bn_gamma = 1.0 + 0.1 * jax.random.normal(ks[5], (C,), jnp.float32)
    bn_beta = 0.1 * jax.random.normal(ks[6], (C,), jnp.float32)
    bn_mean = 0.1 * jax.random.normal(ks[7], (C,), jnp.float32)
    bn_var = jax.random.uniform(ks[8], (C,), jnp.float32, minval=0.5, maxval=1.5)

    out = lpi_forward(x, H, W, conv1_w, conv1_b, bn_gamma, bn_beta,
                      bn_mean, bn_var, conv2_w, conv2_b)
    out = jax.block_until_ready(out)

    ref = _reference(x, H, W, conv1_w, conv1_b, bn_gamma, bn_beta,
                     bn_mean, bn_var, conv2_w, conv2_b)
    assert out.shape == (B, N, C), out.shape
    max_err = float(jnp.max(jnp.abs(out - ref)))
    assert jnp.allclose(out, ref, atol=1e-4, rtol=1e-4), max_err

    print("KERNEL_OK")
</pallas_src>

<mosaic_0001>
module attributes {stable_mosaic.version = 11 : i64} {
  func.func @_lpi_kernel(%arg0: i32, %arg1: memref<1x16x16x128xf32, #tpu.memory_space<vmem>>, %arg2: memref<22x128xf32, #tpu.memory_space<vmem>>, %arg3: memref<1x16x16x128xf32, #tpu.memory_space<vmem>>, %arg4: memref<18x32x128xf32, #tpu.memory_space<vmem>>) attributes {dimension_semantics = [#tpu.dimension_semantics<parallel>], iteration_bounds = array<i64: 2>, scalar_prefetch = 0 : i64, scratch_operands = 1 : i64, tpu.core_type = #tpu.core_type<tc>, window_params = [{transform_indices = @transform_0, window_bounds = array<i64: 1, 16, 16, 128>}, {pipeline_mode = #tpu.pipeline_mode<synchronous>, transform_indices = @transform_1, window_bounds = array<i64: 22, 128>}, {transform_indices = @transform_2, window_bounds = array<i64: 1, 16, 16, 128>}]} {
    %c0 = arith.constant 0 : index
    %c0_0 = arith.constant 0 : index
    %0 = vector.load %arg2[%c0, %c0_0] : memref<22x128xf32, #tpu.memory_space<vmem>>, vector<22x128xf32>
    %cst = arith.constant 0.000000e+00 : f32
    %1 = vector.broadcast %cst : f32 to vector<18x8x128xf32>
    %c0_1 = arith.constant 0 : index
    %c0_2 = arith.constant 0 : index
    %c0_3 = arith.constant 0 : index
    %2 = vector.load %arg4[%c0_1, %c0_2, %c0_3] : memref<18x32x128xf32, #tpu.memory_space<vmem>>, vector<18x8x128xf32>
    tpu.vector_store %arg4[%c0_1, %c0_2, %c0_3], %1 {strides = array<i32>} : memref<18x32x128xf32, #tpu.memory_space<vmem>>, vector<18x8x128xf32>,
    %cst_4 = arith.constant 0.000000e+00 : f32
    %3 = vector.broadcast %cst_4 : f32 to vector<18x8x128xf32>
    %c0_5 = arith.constant 0 : index
    %c24 = arith.constant 24 : index
    %c0_6 = arith.constant 0 : index
    %4 = vector.load %arg4[%c0_5, %c24, %c0_6] : memref<18x32x128xf32, #tpu.memory_space<vmem>>, vector<18x8x128xf32>
    tpu.vector_store %arg4[%c0_5, %c24, %c0_6], %3 {strides = array<i32>} : memref<18x32x128xf32, #tpu.memory_space<vmem>>, vector<18x8x128xf32>,
    %cst_7 = arith.constant 0.000000e+00 : f32
    %5 = vector.broadcast %cst_7 : f32 to vector<1x32x128xf32>
    %c0_8 = arith.constant 0 : index
    %c0_9 = arith.constant 0 : index
    %c0_10 = arith.constant 0 : index
    %6 = vector.load %arg4[%c0_8, %c0_9, %c0_10] : memref<18x32x128xf32, #tpu.memory_space<vmem>>, vector<1x32x128xf32>
    tpu.vector_store %arg4[%c0_8, %c0_9, %c0_10], %5 {strides = array<i32>} : memref<18x32x128xf32, #tpu.memory_space<vmem>>, vector<1x32x128xf32>,
    %cst_11 = arith.constant 0.000000e+00 : f32
    %7 = vector.broadcast %cst_11 : f32 to vector<1x32x128xf32>
    %c17 = arith.constant 17 : index
    %c0_12 = arith.constant 0 : index
    %c0_13 = arith.constant 0 : index
    %8 = vector.load %arg4[%c17, %c0_12, %c0_13] : memref<18x32x128xf32, #tpu.memory_space<vmem>>, vector<1x32x128xf32>
    tpu.vector_store %arg4[%c17, %c0_12, %c0_13], %7 {strides = array<i32>} : memref<18x32x128xf32, #tpu.memory_space<vmem>>, vector<1x32x128xf32>,
    %c0_14 = arith.constant 0 : index
    %c0_15 = arith.constant 0 : index
    %c0_16 = arith.constant 0 : index
    %c0_17 = arith.constant 0 : index
    %9 = vector.load %arg1[%c0_14, %c0_15, %c0_16, %c0_17] : memref<1x16x16x128xf32, #tpu.memory_space<vmem>>, vector<1x16x16x128xf32>
    %10 = vector.shape_cast %9 : vector<1x16x16x128xf32> to vector<16x16x128xf32>
    %c1 = arith.constant 1 : index
    %c8 = arith.constant 8 : index
    %c0_18 = arith.constant 0 : index
    %11 = vector.load %arg4[%c1, %c8, %c0_18] : memref<18x32x128xf32, #tpu.memory_space<vmem>>, vector<16x16x128xf32>
    tpu.vector_store %arg4[%c1, %c8, %c0_18], %10 {strides = array<i32>} : memref<18x32x128xf32, #tpu.memory_space<vmem>>, vector<16x16x128xf32>,
    %c0_19 = arith.constant 0 : index
    %c7 = arith.constant 7 : index
    %c0_20 = arith.constant 0 : index
    %12 = vector.load %arg4[%c0_19, %c7, %c0_20] : memref<18x32x128xf32, #tpu.memory_space<vmem>>, vector<18x16x128xf32>
    %13 = vector.extract_strided_slice %12 {offsets = [0, 0, 0], sizes = [16, 16, 128], strides = [1, 1, 1]} : vector<18x16x128xf32> to vector<16x16x128xf32>
    %14 = vector.extract_strided_slice %0 {offsets = [0, 0], sizes = [1, 128], strides = [1, 1]} : vector<22x128xf32> to vector<1x128xf32>
    %15 = vector.shape_cast %14 : vector<1x128xf32> to vector<1x1x128xf32>
    %16 = vector.broadcast %15 : vector<1x1x128xf32> to vector<16x16x128xf32>
    %17 = arith.mulf %13, %16 : vector<16x16x128xf32>
    %18 = vector.extract_strided_slice %12 {offsets = [1, 0, 0], sizes = [16, 16, 128], strides = [1, 1, 1]} : vector<18x16x128xf32> to vector<16x16x128xf32>
    %19 = vector.extract_strided_slice %0 {offsets = [3, 0], sizes = [1, 128], strides = [1, 1]} : vector<22x128xf32> to vector<1x128xf32>
    %20 = vector.shape_cast %19 : vector<1x128xf32> to vector<1x1x128xf32>
    %21 = vector.broadcast %20 : vector<1x1x128xf32> to vector<16x16x128xf32>
    %22 = arith.mulf %18, %21 : vector<16x16x128xf32>
    %23 = arith.addf %17, %22 : vector<16x16x128xf32>
    %24 = vector.extract_strided_slice %12 {offsets = [2, 0, 0], sizes = [16, 16, 128], strides = [1, 1, 1]} : vector<18x16x128xf32> to vector<16x16x128xf32>
    %25 = vector.extract_strided_slice %0 {offsets = [6, 0], sizes = [1, 128], strides = [1, 1]} : vector<22x128xf32> to vector<1x128xf32>
    %26 = vector.shape_cast %25 : vector<1x128xf32> to vector<1x1x128xf32>
    %27 = vector.broadcast %26 : vector<1x1x128xf32> to vector<16x16x128xf32>
    %28 = arith.mulf %24, %27 : vector<16x16x128xf32>
    %29 = arith.addf %23, %28 : vector<16x16x128xf32>
    %c0_21 = arith.constant 0 : index
    %c8_22 = arith.constant 8 : index
    %c0_23 = arith.constant 0 : index
    %30 = vector.load %arg4[%c0_21, %c8_22, %c0_23] : memref<18x32x128xf32, #tpu.memory_space<vmem>>, vector<18x16x128xf32>
    %31 = vector.extract_strided_slice %30 {offsets = [0, 0, 0], sizes = [16, 16, 128], strides = [1, 1, 1]} : vector<18x16x128xf32> to vector<16x16x128xf32>
    %32 = vector.extract_strided_slice %0 {offsets = [1, 0], sizes = [1, 128], strides = [1, 1]} : vector<22x128xf32> to vector<1x128xf32>
    %33 = vector.shape_cast %32 : vector<1x128xf32> to vector<1x1x128xf32>
    %34 = vector.broadcast %33 : vector<1x1x128xf32> to vector<16x16x128xf32>
    %35 = arith.mulf %31, %34 : vector<16x16x128xf32>
    %36 = arith.addf %29, %35 : vector<16x16x128xf32>
    %37 = vector.extract_strided_slice %30 {offsets = [1, 0, 0], sizes = [16, 16, 128], strides = [1, 1, 1]} : vector<18x16x128xf32> to vector<16x16x128xf32>
    %38 = vector.extract_strided_slice %0 {offsets = [4, 0], sizes = [1, 128], strides = [1, 1]} : vector<22x128xf32> to vector<1x128xf32>
    %39 = vector.shape_cast %38 : vector<1x128xf32> to vector<1x1x128xf32>
    %40 = vector.broadcast %39 : vector<1x1x128xf32> to vector<16x16x128xf32>
    %41 = arith.mulf %37, %40 : vector<16x16x128xf32>
    %42 = arith.addf %36, %41 : vector<16x16x128xf32>
    %43 = vector.extract_strided_slice %30 {offsets = [2, 0, 0], sizes = [16, 16, 128], strides = [1, 1, 1]} : vector<18x16x128xf32> to vector<16x16x128xf32>
    %44 = vector.extract_strided_slice %0 {offsets = [7, 0], sizes = [1, 128], strides = [1, 1]} : vector<22x128xf32> to vector<1x128xf32>
    %45 = vector.shape_cast %44 : vector<1x128xf32> to vector<1x1x128xf32>
    %46 = vector.broadcast %45 : vector<1x1x128xf32> to vector<16x16x128xf32>
    %47 = arith.mulf %43, %46 : vector<16x16x128xf32>
    %48 = arith.addf %42, %47 : vector<16x16x128xf32>
    %c0_24 = arith.constant 0 : index
    %c9 = arith.constant 9 : index
    %c0_25 = arith.constant 0 : index
    %49 = vector.load %arg4[%c0_24, %c9, %c0_25] : memref<18x32x128xf32, #tpu.memory_space<vmem>>, vector<18x16x128xf32>
    %50 = vector.extract_strided_slice %49 {offsets = [0, 0, 0], sizes = [16, 16, 128], strides = [1, 1, 1]} : vector<18x16x128xf32> to vector<16x16x128xf32>
    %51 = vector.extract_strided_slice %0 {offsets = [2, 0], sizes = [1, 128], strides = [1, 1]} : vector<22x128xf32> to vector<1x128xf32>
    %52 = vector.shape_cast %51 : vector<1x128xf32> to vector<1x1x128xf32>
    %53 = vector.broadcast %52 : vector<1x1x128xf32> to vector<16x16x128xf32>
    %54 = arith.mulf %50, %53 : vector<16x16x128xf32>
    %55 = arith.addf %48, %54 : vector<16x16x128xf32>
    %56 = vector.extract_strided_slice %49 {offsets = [1, 0, 0], sizes = [16, 16, 128], strides = [1, 1, 1]} : vector<18x16x128xf32> to vector<16x16x128xf32>
    %57 = vector.extract_strided_slice %0 {offsets = [5, 0], sizes = [1, 128], strides = [1, 1]} : vector<22x128xf32> to vector<1x128xf32>
    %58 = vector.shape_cast %57 : vector<1x128xf32> to vector<1x1x128xf32>
    %59 = vector.broadcast %58 : vector<1x1x128xf32> to vector<16x16x128xf32>
    %60 = arith.mulf %56, %59 : vector<16x16x128xf32>
    %61 = arith.addf %55, %60 : vector<16x16x128xf32>
    %62 = vector.extract_strided_slice %49 {offsets = [2, 0, 0], sizes = [16, 16, 128], strides = [1, 1, 1]} : vector<18x16x128xf32> to vector<16x16x128xf32>
    %63 = vector.extract_strided_slice %0 {offsets = [8, 0], sizes = [1, 128], strides = [1, 1]} : vector<22x128xf32> to vector<1x128xf32>
    %64 = vector.shape_cast %63 : vector<1x128xf32> to vector<1x1x128xf32>
    %65 = vector.broadcast %64 : vector<1x1x128xf32> to vector<16x16x128xf32>
    %66 = arith.mulf %62, %65 : vector<16x16x128xf32>
    %67 = arith.addf %61, %66 : vector<16x16x128xf32>
    %68 = vector.extract_strided_slice %0 {offsets = [18, 0], sizes = [1, 128], strides = [1, 1]} : vector<22x128xf32> to vector<1x128xf32>
    %69 = vector.shape_cast %68 : vector<1x128xf32> to vector<1x1x128xf32>
    %70 = vector.broadcast %69 : vector<1x1x128xf32> to vector<16x16x128xf32>
    %71 = arith.addf %67, %70 : vector<16x16x128xf32>
    %cst_26 = arith.constant 5.000000e-01 : f32
    %72 = vector.broadcast %cst_26 : f32 to vector<16x16x128xf32>
    %73 = arith.mulf %72, %71 : vector<16x16x128xf32>
    %cst_27 = arith.constant 4.471500e-02 : f32
    %74 = vector.broadcast %cst_27 : f32 to vector<16x16x128xf32>
    %75 = arith.mulf %74, %71 : vector<16x16x128xf32>
    %76 = arith.mulf %75, %71 : vector<16x16x128xf32>
    %77 = arith.mulf %76, %71 : vector<16x16x128xf32>
    %78 = arith.addf %71, %77 : vector<16x16x128xf32>
    %cst_28 = arith.constant 0.797884583 : f32
    %79 = vector.broadcast %cst_28 : f32 to vector<16x16x128xf32>
    %80 = arith.mulf %79, %78 : vector<16x16x128xf32>
    %81 = math.tanh %80 : vector<16x16x128xf32>
    %cst_29 = arith.constant 1.000000e+00 : f32
    %82 = vector.broadcast %cst_29 : f32 to vector<16x16x128xf32>
    %83 = arith.addf %82, %81 : vector<16x16x128xf32>
    %84 = arith.mulf %73, %83 : vector<16x16x128xf32>
    %85 = vector.extract_strided_slice %0 {offsets = [20, 0], sizes = [1, 128], strides = [1, 1]} : vector<22x128xf32> to vector<1x128xf32>
    %86 = vector.shape_cast %85 : vector<1x128xf32> to vector<1x1x128xf32>
    %87 = vector.broadcast %86 : vector<1x1x128xf32> to vector<16x16x128xf32>
    %88 = arith.mulf %84, %87 : vector<16x16x128xf32>
    %89 = vector.extract_strided_slice %0 {offsets = [21, 0], sizes = [1, 128], strides = [1, 1]} : vector<22x128xf32> to vector<1x128xf32>
    %90 = vector.shape_cast %89 : vector<1x128xf32> to vector<1x1x128xf32>
    %91 = vector.broadcast %90 : vector<1x1x128xf32> to vector<16x16x128xf32>
    %92 = arith.addf %88, %91 : vector<16x16x128xf32>
    %c1_30 = arith.constant 1 : index
    %c8_31 = arith.constant 8 : index
    %c0_32 = arith.constant 0 : index
    %93 = vector.load %arg4[%c1_30, %c8_31, %c0_32] : memref<18x32x128xf32, #tpu.memory_space<vmem>>, vector<16x16x128xf32>
    tpu.vector_store %arg4[%c1_30, %c8_31, %c0_32], %92 {strides = array<i32>} : memref<18x32x128xf32, #tpu.memory_space<vmem>>, vector<16x16x128xf32>,
    %c0_33 = arith.constant 0 : index
    %c7_34 = arith.constant 7 : index
    %c0_35 = arith.constant 0 : index
    %94 = vector.load %arg4[%c0_33, %c7_34, %c0_35] : memref<18x32x128xf32, #tpu.memory_space<vmem>>, vector<18x16x128xf32>
    %95 = vector.extract_strided_slice %94 {offsets = [0, 0, 0], sizes = [16, 16, 128], strides = [1, 1, 1]} : vector<18x16x128xf32> to vector<16x16x128xf32>
    %96 = vector.extract_strided_slice %0 {offsets = [9, 0], sizes = [1, 128], strides = [1, 1]} : vector<22x128xf32> to vector<1x128xf32>
    %97 = vector.shape_cast %96 : vector<1x128xf32> to vector<1x1x128xf32>
    %98 = vector.broadcast %97 : vector<1x1x128xf32> to vector<16x16x128xf32>
    %99 = arith.mulf %95, %98 : vector<16x16x128xf32>
    %100 = vector.extract_strided_slice %94 {offsets = [1, 0, 0], sizes = [16, 16, 128], strides = [1, 1, 1]} : vector<18x16x128xf32> to vector<16x16x128xf32>
    %101 = vector.extract_strided_slice %0 {offsets = [12, 0], sizes = [1, 128], strides = [1, 1]} : vector<22x128xf32> to vector<1x128xf32>
    %102 = vector.shape_cast %101 : vector<1x128xf32> to vector<1x1x128xf32>
    %103 = vector.broadcast %102 : vector<1x1x128xf32> to vector<16x16x128xf32>
    %104 = arith.mulf %100, %103 : vector<16x16x128xf32>
    %105 = arith.addf %99, %104 : vector<16x16x128xf32>
    %106 = vector.extract_strided_slice %94 {offsets = [2, 0, 0], sizes = [16, 16, 128], strides = [1, 1, 1]} : vector<18x16x128xf32> to vector<16x16x128xf32>
    %107 = vector.extract_strided_slice %0 {offsets = [15, 0], sizes = [1, 128], strides = [1, 1]} : vector<22x128xf32> to vector<1x128xf32>
    %108 = vector.shape_cast %107 : vector<1x128xf32> to vector<1x1x128xf32>
    %109 = vector.broadcast %108 : vector<1x1x128xf32> to vector<16x16x128xf32>
    %110 = arith.mulf %106, %109 : vector<16x16x128xf32>
    %111 = arith.addf %105, %110 : vector<16x16x128xf32>
    %c0_36 = arith.constant 0 : index
    %c8_37 = arith.constant 8 : index
    %c0_38 = arith.constant 0 : index
    %112 = vector.load %arg4[%c0_36, %c8_37, %c0_38] : memref<18x32x128xf32, #tpu.memory_space<vmem>>, vector<18x16x128xf32>
    %113 = vector.extract_strided_slice %112 {offsets = [0, 0, 0], sizes = [16, 16, 128], strides = [1, 1, 1]} : vector<18x16x128xf32> to vector<16x16x128xf32>
    %114 = vector.extract_strided_slice %0 {offsets = [10, 0], sizes = [1, 128], strides = [1, 1]} : vector<22x128xf32> to vector<1x128xf32>
    %115 = vector.shape_cast %114 : vector<1x128xf32> to vector<1x1x128xf32>
    %116 = vector.broadcast %115 : vector<1x1x128xf32> to vector<16x16x128xf32>
    %117 = arith.mulf %113, %116 : vector<16x16x128xf32>
    %118 = arith.addf %111, %117 : vector<16x16x128xf32>
    %119 = vector.extract_strided_slice %112 {offsets = [1, 0, 0], sizes = [16, 16, 128], strides = [1, 1, 1]} : vector<18x16x128xf32> to vector<16x16x128xf32>
    %120 = vector.extract_strided_slice %0 {offsets = [13, 0], sizes = [1, 128], strides = [1, 1]} : vector<22x128xf32> to vector<1x128xf32>
    %121 = vector.shape_cast %120 : vector<1x128xf32> to vector<1x1x128xf32>
    %122 = vector.broadcast %121 : vector<1x1x128xf32> to vector<16x16x128xf32>
    %123 = arith.mulf %119, %122 : vector<16x16x128xf32>
    %124 = arith.addf %118, %123 : vector<16x16x128xf32>
    %125 = vector.extract_strided_slice %112 {offsets = [2, 0, 0], sizes = [16, 16, 128], strides = [1, 1, 1]} : vector<18x16x128xf32> to vector<16x16x128xf32>
    %126 = vector.extract_strided_slice %0 {offsets = [16, 0], sizes = [1, 128], strides = [1, 1]} : vector<22x128xf32> to vector<1x128xf32>
    %127 = vector.shape_cast %126 : vector<1x128xf32> to vector<1x1x128xf32>
    %128 = vector.broadcast %127 : vector<1x1x128xf32> to vector<16x16x128xf32>
    %129 = arith.mulf %125, %128 : vector<16x16x128xf32>
    %130 = arith.addf %124, %129 : vector<16x16x128xf32>
    %c0_39 = arith.constant 0 : index
    %c9_40 = arith.constant 9 : index
    %c0_41 = arith.constant 0 : index
    %131 = vector.load %arg4[%c0_39, %c9_40, %c0_41] : memref<18x32x128xf32, #tpu.memory_space<vmem>>, vector<18x16x128xf32>
    %132 = vector.extract_strided_slice %131 {offsets = [0, 0, 0], sizes = [16, 16, 128], strides = [1, 1, 1]} : vector<18x16x128xf32> to vector<16x16x128xf32>
    %133 = vector.extract_strided_slice %0 {offsets = [11, 0], sizes = [1, 128], strides = [1, 1]} : vector<22x128xf32> to vector<1x128xf32>
    %134 = vector.shape_cast %133 : vector<1x128xf32> to vector<1x1x128xf32>
    %135 = vector.broadcast %134 : vector<1x1x128xf32> to vector<16x16x128xf32>
    %136 = arith.mulf %132, %135 : vector<16x16x128xf32>
    %137 = arith.addf %130, %136 : vector<16x16x128xf32>
    %138 = vector.extract_strided_slice %131 {offsets = [1, 0, 0], sizes = [16, 16, 128], strides = [1, 1, 1]} : vector<18x16x128xf32> to vector<16x16x128xf32>
    %139 = vector.extract_strided_slice %0 {offsets = [14, 0], sizes = [1, 128], strides = [1, 1]} : vector<22x128xf32> to vector<1x128xf32>
    %140 = vector.shape_cast %139 : vector<1x128xf32> to vector<1x1x128xf32>
    %141 = vector.broadcast %140 : vector<1x1x128xf32> to vector<16x16x128xf32>
    %142 = arith.mulf %138, %141 : vector<16x16x128xf32>
    %143 = arith.addf %137, %142 : vector<16x16x128xf32>
    %144 = vector.extract_strided_slice %131 {offsets = [2, 0, 0], sizes = [16, 16, 128], strides = [1, 1, 1]} : vector<18x16x128xf32> to vector<16x16x128xf32>
    %145 = vector.extract_strided_slice %0 {offsets = [17, 0], sizes = [1, 128], strides = [1, 1]} : vector<22x128xf32> to vector<1x128xf32>
    %146 = vector.shape_cast %145 : vector<1x128xf32> to vector<1x1x128xf32>
    %147 = vector.broadcast %146 : vector<1x1x128xf32> to vector<16x16x128xf32>
    %148 = arith.mulf %144, %147 : vector<16x16x128xf32>
    %149 = arith.addf %143, %148 : vector<16x16x128xf32>
    %150 = vector.extract_strided_slice %0 {offsets = [19, 0], sizes = [1, 128], strides = [1, 1]} : vector<22x128xf32> to vector<1x128xf32>
    %151 = vector.shape_cast %150 : vector<1x128xf32> to vector<1x1x128xf32>
    %152 = vector.broadcast %151 : vector<1x1x128xf32> to vector<16x16x128xf32>
    %153 = arith.addf %149, %152 : vector<16x16x128xf32>
    %c0_42 = arith.constant 0 : index
    %c0_43 = arith.constant 0 : index
    %c0_44 = arith.constant 0 : index
    %c0_45 = arith.constant 0 : index
    %154 = vector.load %arg3[%c0_42, %c0_43, %c0_44, %c0_45] : memref<1x16x16x128xf32, #tpu.memory_space<vmem>>, vector<1x16x16x128xf32>
    %155 = vector.shape_cast %154 : vector<1x16x16x128xf32> to vector<16x16x128xf32>
    %156 = vector.shape_cast %153 : vector<16x16x128xf32> to vector<1x16x16x128xf32>
    tpu.vector_store %arg3[%c0_42, %c0_43, %c0_44, %c0_45], %156 {strides = array<i32>} : memref<1x16x16x128xf32, #tpu.memory_space<vmem>>, vector<1x16x16x128xf32>,
    return
  }
  func.func @transform_0(%arg0: i32) -> (i32, i32, i32, i32) {
    %c0_i32 = arith.constant 0 : i32
    %c0_i32_0 = arith.constant 0 : i32
    %c0_i32_1 = arith.constant 0 : i32
    %c0_i32_2 = arith.constant 0 : i32
    return %arg0, %c0_i32, %c0_i32_0, %c0_i32_1 : i32, i32, i32, i32
  }
  func.func @transform_1(%arg0: i32) -> (i32, i32) {
    %c0_i32 = arith.constant 0 : i32
    %c0_i32_0 = arith.constant 0 : i32
    %c0_i32_1 = arith.constant 0 : i32
    return %c0_i32, %c0_i32_0 : i32, i32
  }
  func.func @transform_2(%arg0: i32) -> (i32, i32, i32, i32) {
    %c0_i32 = arith.constant 0 : i32
    %c0_i32_0 = arith.constant 0 : i32
    %c0_i32_1 = arith.constant 0 : i32
    %c0_i32_2 = arith.constant 0 : i32
    return %arg0, %c0_i32, %c0_i32_0, %c0_i32_1 : i32, i32, i32, i32
  }
}

</mosaic_0001>

<llo_original>
// kernel: tpu_custom_call.1
$region0: #{tpu_custom_call.1}
  #allocation0 [shape = 'u32[]', space=smem, size = 0x4, offset = 0x4, fixed_abs, tag = 'smem constant byte address 0x4 - core index']
  #allocation1 [shape = 'u32[72,128]{1,0:T(1,128)}', space=vmem, size = 0x9000, scoped, tag = 'internal scratch']
  #allocation2 [shape = 'f32[18,32,128]{2,1,0:T(8,128)}', space=vmem, size = 0x48000, scoped, tag = 'scratch operand']
  %s0 = inlined_call_operand.hbm [shape: f32[2,16,16,128], index: 0, kind: input, shape index: {}]
  %s1 = inlined_call_operand.hbm [shape: f32[22,128], index: 1, kind: input, shape index: {}]
  %s2 = inlined_call_operand.hbm [shape: f32[2,16,16,128], index: 2, kind: output, shape index: {}]
  %s3 = sld [smem:[#allocation0]]
  $region49: #{tpu_custom_call.1} parent=0
    _
  %s5 = ssub.s32 1, %s3
  %s6 = scalar_select 0, %s5, %s3
  $region1: #{tpu_custom_call.1} parent=0
    #allocation3 [shape = 'u8[262144]{0}', space=vmem, size = 0x40000, scoped, tag = 'input window, operand 0']
    #allocation4 [shape = 's32[2]{0}', space=sflag, size = 0x8, scoped, tag = 'scoped memory for tpu_custom_call.1']
    #allocation5 [shape = 's32[2]{0}', space=sflag, size = 0x8, scoped, tag = 'scoped memory for tpu_custom_call.1']
    #allocation6 [shape = 'u8[12288]{0}', space=vmem, size = 0x3000, scoped, tag = 'input window, operand 1, single buffered']
    #allocation7 [shape = 's32[1]{0}', space=sflag, size = 0x4, scoped, tag = 'scoped memory for tpu_custom_call.1']
    #allocation8 [shape = 'u8[262144]{0}', space=vmem, size = 0x40000, scoped, tag = 'output window, operand 0']
    %7 = vsyncpa [#allocation4], 0
    %s8 = scalar_lea.sflag [#allocation4], 1
    %9 = vsyncpa %s8, 0
    %10 = vsyncpa [#allocation7], 0
    %11 = vsyncpa [#allocation5], 0
    %s12 = scalar_lea.sflag [#allocation5], 1
    %13 = vsyncpa %s12, 0
    loop: start=0, step=1, limit=4
    $region2: #{tpu_custom_call.1} parent=1 // loop_pre_header
      _
    $region3: #{tpu_custom_call.1} parent=1 // loop_header
      %s15 = sphi 0, %s19
      %p16 = scmp.ge.s32.totalorder %s15, 4
      %s25 = sphi 0, %s27
      %s28 = sphi 0, %s25
      %s29 = sphi 0, %s28
      %s45 = sphi 0, %s29
      %s49 = sphi 0, %s49
      %s51 = sphi 0, %s49
      %s52 = sphi 0, %s51
      %s66 = sphi 0, %s52
      %s72 = sphi 0, %s74
      %s75 = sphi 0, %s72
      %s76 = sphi 0, %s75
      %s92 = sphi 0, %s76
    $region4: #{tpu_custom_call.1} parent=1 // loop_header_branch
      %18 = sbr.rel (%p16) target = $region8
    $region5: #{tpu_custom_call.1} parent=1 // loop_body
      %s20 = ssub.s32 %s15, 1
      %s21 = ssub.s32 %s15, 2
      %s22 = sadd.s32 %s15, 1
      %s23 = ssub.s32 %s15, %s22
      %p24 = scmp.eq.s32.totalorder %s23, 0
      %s26 = sadd.s32 %s25, 1
      %s27 = scalar_select %p24, %s25, %s26
      %p30 = pneg %p24
      %p31 = scmp.eq.s32.totalorder %s15, 1
      %p32 = por %p30, %p31
      %p33 = scmp.ne.s32.totalorder %s25, %s28
      %p34 = scmp.eq.s32.totalorder %s15, 0
      %p35 = por %p33, %p34
      %p36 = scmp.ne.s32.totalorder %s25, %s28
      %p37 = scmp.eq.s32.totalorder %s20, 1
      %p38 = por %p36, %p37
      %p39 = scmp.ne.s32.totalorder %s28, %s29
      %p40 = scmp.eq.s32.totalorder %s20, 0
      %p41 = por %p39, %p40
      %p42 = scmp.ne.s32.totalorder %s28, %s29
      %p43 = scmp.eq.s32.totalorder %s21, 1
      %p44 = por %p42, %p43
      %p46 = scmp.ne.s32.totalorder %s29, %s45
      %p47 = scmp.eq.s32.totalorder %s21, 0
      %p48 = por %p46, %p47
      %s50 = sadd.s32 %s49, 1
      %p53 = scmp.eq.s32.totalorder %s15, 1
      %p54 = scmp.ne.s32.totalorder %s49, %s51
      %p55 = scmp.eq.s32.totalorder %s15, 0
      %p56 = por %p54, %p55
      %p57 = scmp.ne.s32.totalorder %s49, %s51
      %p58 = scmp.eq.s32.totalorder %s20, 1
      %p59 = por %p57, %p58
      %p60 = scmp.ne.s32.totalorder %s51, %s52
      %p61 = scmp.eq.s32.totalorder %s20, 0
      %p62 = por %p60, %p61
      %p63 = scmp.ne.s32.totalorder %s51, %s52
      %p64 = scmp.eq.s32.totalorder %s21, 1
      %p65 = por %p63, %p64
      %p67 = scmp.ne.s32.totalorder %s52, %s66
      %p68 = scmp.eq.s32.totalorder %s21, 0
      %p69 = por %p67, %p68
      %s70 = ssub.s32 %s15, %s22
      %p71 = scmp.eq.s32.totalorder %s70, 0
      %s73 = sadd.s32 %s72, 1
      %s74 = scalar_select %p71, %s72, %s73
      %p77 = pneg %p71
      %p78 = scmp.eq.s32.totalorder %s15, 1
      %p79 = por %p77, %p78
      %p80 = scmp.ne.s32.totalorder %s72, %s75
      %p81 = scmp.eq.s32.totalorder %s15, 0
      %p82 = por %p80, %p81
      %p83 = scmp.ne.s32.totalorder %s72, %s75
      %p84 = scmp.eq.s32.totalorder %s20, 1
      %p85 = por %p83, %p84
      %p86 = scmp.ne.s32.totalorder %s75, %s76
      %p87 = scmp.eq.s32.totalorder %s20, 0
      %p88 = por %p86, %p87
      %p89 = scmp.ne.s32.totalorder %s75, %s76
      %p90 = scmp.eq.s32.totalorder %s21, 1
      %p91 = por %p89, %p90
      %p93 = scmp.ne.s32.totalorder %s76, %s92
      %p94 = scmp.eq.s32.totalorder %s21, 0
      %p95 = por %p93, %p94
      %p96 = scmp.le.s32.totalorder 1, %s15
      %p97 = scmp.lt.s32.totalorder %s15, 3
      %p98 = pnand %p96, %p97
      %p99 = pneg %p98
      // Predicated region
      $region9: #{tpu_custom_call.1} parent=5 // pred_check
        _
      $region10: #{tpu_custom_call.1} parent=5 // pred_check_branch
        %101 = sbr.rel (%p98) target = $region12
      $region11: #{tpu_custom_call.1} parent=5 // pred_region
        %s102 = ssub.s32 %s15, 1
        // Predicated region
        $region13: #{tpu_custom_call.1} parent=11 // pred_check
          %p103 = pneg %p62
        $region14: #{tpu_custom_call.1} parent=11 // pred_check_branch
          %105 = sbr.rel (%p103) target = $region16
        $region15: #{tpu_custom_call.1} parent=11 // pred_region
          %107 = vsyncadd [#allocation7], 0
          %s108 = sshll.u32 %s1, 4
          %s109 = int_to_ptr.hbm [resolvable:$true] %s108
          %s110 = sshll.u32 [#allocation6], 4
          %s111 = int_to_ptr.vmem [resolvable:$true] %s110
          %116 = dma.hbm_to_vmem [thread:$0]  %s109, 384, %s111, [#allocation7], 128, 128, 8
        $region16: #{tpu_custom_call.1} parent=11 // pred_fallthru
          _
      $region12: #{tpu_custom_call.1} parent=5 // pred_fallthru
        _
      %p117 = scmp.lt.s32.totalorder %s15, 2
      // Predicated region
      $region17: #{tpu_custom_call.1} parent=5 // pred_check
        %p118 = pneg %p117
      $region18: #{tpu_custom_call.1} parent=5 // pred_check_branch
        %120 = sbr.rel (%p118) target = $region20
      $region19: #{tpu_custom_call.1} parent=5 // pred_region
        // Predicated region
        $region21: #{tpu_custom_call.1} parent=19 // pred_check
          %p121 = pneg %p35
        $region22: #{tpu_custom_call.1} parent=19 // pred_check_branch
          %123 = sbr.rel (%p121) target = $region24
        $region23: #{tpu_custom_call.1} parent=19 // pred_region
          %s124 = sand.u32 %s25, 1
          %s125 = scalar_lea.sflag [#allocation4], %s124
          %s126 = sand.u32 %s25, 1
          %s127 = smul.addr %s126, 256
          %s128 = scalar_lea.vmem [#allocation3], %s127
          %130 = vsyncadd %s125, 0
          %s131 = smul.addr %s15, 32
          %s132 = smul.addr %s131, 8
          %s133 = scalar_lea.hbm %s0, %s132
          %s134 = sshll.u32 %s133, 4
          %s135 = int_to_ptr.hbm [resolvable:$true] %s134
          %s136 = sshll.u32 %s128, 4
          %s137 = int_to_ptr.vmem [resolvable:$true] %s136
          %142 = dma.hbm_to_vmem [thread:$0]  %s135, 4096, %s137, %s125, 128, 128, 8
        $region24: #{tpu_custom_call.1} parent=19 // pred_fallthru
          _
      $region20: #{tpu_custom_call.1} parent=5 // pred_fallthru
        _
      %p143 = scmp.le.s32.totalorder 1, %s15
      %p144 = scmp.lt.s32.totalorder %s15, 3
      %p145 = pnand %p143, %p144
      %p146 = pneg %p145
      // Predicated region
      $region25: #{tpu_custom_call.1} parent=5 // pred_check
        _
      $region26: #{tpu_custom_call.1} parent=5 // pred_check_branch
        %148 = sbr.rel (%p145) target = $region28
      $region27: #{tpu_custom_call.1} parent=5 // pred_region
        %s149 = ssub.s32 %s15, 1
        %s150 = sand.u32 %s28, 1
        %s151 = scalar_lea.sflag [#allocation4], %s150
        %s152 = sand.u32 %s28, 1
        %s153 = smul.addr %s152, 256
        %s154 = scalar_lea.vmem [#allocation3], %s153
        // Predicated region
        $region29: #{tpu_custom_call.1} parent=27 // pred_check
          %p155 = pneg %p41
        $region30: #{tpu_custom_call.1} parent=27 // pred_check_branch
          %157 = sbr.rel (%p155) target = $region32
        $region31: #{tpu_custom_call.1} parent=27 // pred_region
          %159 = dma.done %s151, 4096
        $region32: #{tpu_custom_call.1} parent=27 // pred_fallthru
          _
        // Predicated region
        $region33: #{tpu_custom_call.1} parent=27 // pred_check
          %p160 = pneg %p62
        $region34: #{tpu_custom_call.1} parent=27 // pred_check_branch
          %162 = sbr.rel (%p160) target = $region36
        $region35: #{tpu_custom_call.1} parent=27 // pred_region
          %164 = dma.done [#allocation7], 384
        $region36: #{tpu_custom_call.1} parent=27 // pred_fallthru
          _
        %s165 = sand.u32 %s28, 1
        %s166 = scalar_lea.sflag [#allocation4], %s165
        %s167 = sand.u32 %s28, 1
        %s168 = smul.addr %s167, 256
        %s169 = scalar_lea.vmem [#allocation3], %s168
        %p170 = pneg %p41
        %p171 = pneg %p38
        %p172 = pneg %p62
        %p173 = pneg %p59
        %p174 = pneg %p88
        %p175 = pneg %p85
        %s176 = sand.u32 %s75, 1
        %s177 = scalar_lea.sflag [#allocation5], %s176
        %s178 = sand.u32 %s75, 1
        %s179 = smul.addr %s178, 256
        %s180 = scalar_lea.vmem [#allocation8], %s179
        %v181 = vld [vmem:[#allocation6] sm:$0xff]
        %v182 = vld [vmem:[#allocation6 + $0x8] sm:$0xff]
        %v183 = vld [vmem:[#allocation6 + $0x10] sm:$0x3f]
        %184 = vst [vmem:[#allocation2] sm:$0xff] 0.0
        %185 = vst [vmem:[#allocation2 + $0x20] sm:$0xff] 0.0
        %186 = vst [vmem:[#allocation2 + $0x40] sm:$0xff] 0.0
        %187 = vst [vmem:[#allocation2 + $0x60] sm:$0xff] 0.0
        %188 = vst [vmem:[#allocation2 + $0x80] sm:$0xff] 0.0
        %189 = vst [vmem:[#allocation2 + $0xa0] sm:$0xff] 0.0
        %190 = vst [vmem:[#allocation2 + $0xc0] sm:$0xff] 0.0
        %191 = vst [vmem:[#allocation2 + $0xe0] sm:$0xff] 0.0
        %192 = vst [vmem:[#allocation2 + $0x100] sm:$0xff] 0.0
        %193 = vst [vmem:[#allocation2 + $0x120] sm:$0xff] 0.0
        %194 = vst [vmem:[#allocation2 + $0x140] sm:$0xff] 0.0
        %195 = vst [vmem:[#allocation2 + $0x160] sm:$0xff] 0.0
        %196 = vst [vmem:[#allocation2 + $0x180] sm:$0xff] 0.0
        %197 = vst [vmem:[#allocation2 + $0x1a0] sm:$0xff] 0.0
        %198 = vst [vmem:[#allocation2 + $0x1c0] sm:$0xff] 0.0
        %199 = vst [vmem:[#allocation2 + $0x1e0] sm:$0xff] 0.0
        %200 = vst [vmem:[#allocation2 + $0x200] sm:$0xff] 0.0
        %201 = vst [vmem:[#allocation2 + $0x220] sm:$0xff] 0.0
        %202 = vst [vmem:[#allocation2 + $0x18] sm:$0xff] 0.0
        %203 = vst [vmem:[#allocation2 + $0x38] sm:$0xff] 0.0
        %204 = vst [vmem:[#allocation2 + $0x58] sm:$0xff] 0.0
        %205 = vst [vmem:[#allocation2 + $0x78] sm:$0xff] 0.0
        %206 = vst [vmem:[#allocation2 + $0x98] sm:$0xff] 0.0
        %207 = vst [vmem:[#allocation2 + $0xb8] sm:$0xff] 0.0
        %208 = vst [vmem:[#allocation2 + $0xd8] sm:$0xff] 0.0
        %209 = vst [vmem:[#allocation2 + $0xf8] sm:$0xff] 0.0
        %210 = vst [vmem:[#allocation2 + $0x118] sm:$0xff] 0.0
        %211 = vst [vmem:[#allocation2 + $0x138] sm:$0xff] 0.0
        %212 = vst [vmem:[#allocation2 + $0x158] sm:$0xff] 0.0
        %213 = vst [vmem:[#allocation2 + $0x178] sm:$0xff] 0.0
        %214 = vst [vmem:[#allocation2 + $0x198] sm:$0xff] 0.0
        %215 = vst [vmem:[#allocation2 + $0x1b8] sm:$0xff] 0.0
        %216 = vst [vmem:[#allocation2 + $0x1d8] sm:$0xff] 0.0
        %217 = vst [vmem:[#allocation2 + $0x1f8] sm:$0xff] 0.0
        %218 = vst [vmem:[#allocation2 + $0x218] sm:$0xff] 0.0
        %219 = vst [vmem:[#allocation2 + $0x238] sm:$0xff] 0.0
        %220 = vst [vmem:[#allocation2] sm:$0xff] 0.0
        %221 = vst [vmem:[#allocation2 + $0x8] sm:$0xff] 0.0
        %222 = vst [vmem:[#allocation2 + $0x10] sm:$0xff] 0.0
        %223 = vst [vmem:[#allocation2 + $0x18] sm:$0xff] 0.0
        %s224 = scalar_lea.vmem [#allocation2], 544
        %225 = vst [vmem:[%s224] sm:$0xff] 0.0
        %226 = vst [vmem:[%s224 + $0x8] sm:$0xff] 0.0
        %227 = vst [vmem:[%s224 + $0x10] sm:$0xff] 0.0
        %228 = vst [vmem:[%s224 + $0x18] sm:$0xff] 0.0
        %v229 = vld [vmem:[%s154] sm:$0xff]
        %v230 = vld [vmem:[%s154 + $0x8] sm:$0xff]
        %v231 = vld [vmem:[%s154 + $0x10] sm:$0xff]
        %v232 = vld [vmem:[%s154 + $0x18] sm:$0xff]
        %v233 = vld [vmem:[%s154 + $0x20] sm:$0xff]
        %v234 = vld [vmem:[%s154 + $0x28] sm:$0xff]
        %v235 = vld [vmem:[%s154 + $0x30] sm:$0xff]
        %v236 = vld [vmem:[%s154 + $0x38] sm:$0xff]
        %v237 = vld [vmem:[%s154 + $0x40] sm:$0xff]
        %v238 = vld [vmem:[%s154 + $0x48] sm:$0xff]
        %v239 = vld [vmem:[%s154 + $0x50] sm:$0xff]
        %v240 = vld [vmem:[%s154 + $0x58] sm:$0xff]
        %v241 = vld [vmem:[%s154 + $0x60] sm:$0xff]
        %v242 = vld [vmem:[%s154 + $0x68] sm:$0xff]
        %v243 = vld [vmem:[%s154 + $0x70] sm:$0xff]
        %v244 = vld [vmem:[%s154 + $0x78] sm:$0xff]
        %v245 = vld [vmem:[%s154 + $0x80] sm:$0xff]
        %v246 = vld [vmem:[%s154 + $0x88] sm:$0xff]
        %v247 = vld [vmem:[%s154 + $0x90] sm:$0xff]
        %v248 = vld [vmem:[%s154 + $0x98] sm:$0xff]
        %v249 = vld [vmem:[%s154 + $0xa0] sm:$0xff]
        %v250 = vld [vmem:[%s154 + $0xa8] sm:$0xff]
        %v251 = vld [vmem:[%s154 + $0xb0] sm:$0xff]
        %v252 = vld [vmem:[%s154 + $0xb8] sm:$0xff]
        %v253 = vld [vmem:[%s154 + $0xc0] sm:$0xff]
        %v254 = vld [vmem:[%s154 + $0xc8] sm:$0xff]
        %v255 = vld [vmem:[%s154 + $0xd0] sm:$0xff]
        %v256 = vld [vmem:[%s154 + $0xd8] sm:$0xff]
        %v257 = vld [vmem:[%s154 + $0xe0] sm:$0xff]
        %v258 = vld [vmem:[%s154 + $0xe8] sm:$0xff]
        %v259 = vld [vmem:[%s154 + $0xf0] sm:$0xff]
        %v260 = vld [vmem:[%s154 + $0xf8] sm:$0xff]
        %s261 = scalar_lea.vmem [#allocation2], 32
        %262 = vst [vmem:[%s261 + $0x8] sm:$0xff] %v229
        %263 = vst [vmem:[%s261 + $0x10] sm:$0xff] %v230
        %264 = vst [vmem:[%s261 + $0x28] sm:$0xff] %v231
        %265 = vst [vmem:[%s261 + $0x30] sm:$0xff] %v232
        %266 = vst [vmem:[%s261 + $0x48] sm:$0xff] %v233
        %267 = vst [vmem:[%s261 + $0x50] sm:$0xff] %v234
        %268 = vst [vmem:[%s261 + $0x68] sm:$0xff] %v235
        %269 = vst [vmem:[%s261 + $0x70] sm:$0xff] %v236
        %270 = vst [vmem:[%s261 + $0x88] sm:$0xff] %v237
        %271 = vst [vmem:[%s261 + $0x90] sm:$0xff] %v238
        %272 = vst [vmem:[%s261 + $0xa8] sm:$0xff] %v239
        %273 = vst [vmem:[%s261 + $0xb0] sm:$0xff] %v240
        %274 = vst [vmem:[%s261 + $0xc8] sm:$0xff] %v241
        %275 = vst [vmem:[%s261 + $0xd0] sm:$0xff] %v242
        %276 = vst [vmem:[%s261 + $0xe8] sm:$0xff] %v243
        %277 = vst [vmem:[%s261 + $0xf0] sm:$0xff] %v244
        %278 = vst [vmem:[%s261 + $0x108] sm:$0xff] %v245
        %279 = vst [vmem:[%s261 + $0x110] sm:$0xff] %v246
        %280 = vst [vmem:[%s261 + $0x128] sm:$0xff] %v247
        %281 = vst [vmem:[%s261 + $0x130] sm:$0xff] %v248
        %282 = vst [vmem:[%s261 + $0x148] sm:$0xff] %v249
        %283 = vst [vmem:[%s261 + $0x150] sm:$0xff] %v250
        %284 = vst [vmem:[%s261 + $0x168] sm:$0xff] %v251
        %285 = vst [vmem:[%s261 + $0x170] sm:$0xff] %v252
        %286 = vst [vmem:[%s261 + $0x188] sm:$0xff] %v253
        %287 = vst [vmem:[%s261 + $0x190] sm:$0xff] %v254
        %288 = vst [vmem:[%s261 + $0x1a8] sm:$0xff] %v255
        %289 = vst [vmem:[%s261 + $0x1b0] sm:$0xff] %v256
        %290 = vst [vmem:[%s261 + $0x1c8] sm:$0xff] %v257
        %291 = vst [vmem:[%s261 + $0x1d0] sm:$0xff] %v258
        %292 = vst [vmem:[%s261 + $0x1e8] sm:$0xff] %v259
        %293 = vst [vmem:[%s261 + $0x1f0] sm:$0xff] %v260
        %v294 = vld [vmem:[#allocation2 + $0x7] sm:$0xff]
        %v295 = vld [vmem:[#allocation2 + $0xf] sm:$0xff]
        %v296 = vld [vmem:[#allocation2 + $0x27] sm:$0xff]
        %v297 = vld [vmem:[#allocation2 + $0x2f] sm:$0xff]
        %v298 = vld [vmem:[#allocation2 + $0x47] sm:$0xff]
        %v299 = vld [vmem:[#allocation2 + $0x4f] sm:$0xff]
        %v300 = vld [vmem:[#allocation2 + $0x67] sm:$0xff]
        %v301 = vld [vmem:[#allocation2 + $0x6f] sm:$0xff]
        %v302 = vld [vmem:[#allocation2 + $0x87] sm:$0xff]
        %v303 = vld [vmem:[#allocation2 + $0x8f] sm:$0xff]
        %v304 = vld [vmem:[#allocation2 + $0xa7] sm:$0xff]
        %v305 = vld [vmem:[#allocation2 + $0xaf] sm:$0xff]
        %v306 = vld [vmem:[#allocation2 + $0xc7] sm:$0xff]
        %v307 = vld [vmem:[#allocation2 + $0xcf] sm:$0xff]
        %v308 = vld [vmem:[#allocation2 + $0xe7] sm:$0xff]
        %v309 = vld [vmem:[#allocation2 + $0xef] sm:$0xff]
        %v310 = vld [vmem:[#allocation2 + $0x107] sm:$0xff]
        %v311 = vld [vmem:[#allocation2 + $0x10f] sm:$0xff]
        %v312 = vld [vmem:[#allocation2 + $0x127] sm:$0xff]
        %v313 = vld [vmem:[#allocation2 + $0x12f] sm:$0xff]
        %v314 = vld [vmem:[#allocation2 + $0x147] sm:$0xff]
        %v315 = vld [vmem:[#allocation2 + $0x14f] sm:$0xff]
        %v316 = vld [vmem:[#allocation2 + $0x167] sm:$0xff]
        %v317 = vld [vmem:[#allocation2 + $0x16f] sm:$0xff]
        %v318 = vld [vmem:[#allocation2 + $0x187] sm:$0xff]
        %v319 = vld [vmem:[#allocation2 + $0x18f] sm:$0xff]
        %v320 = vld [vmem:[#allocation2 + $0x1a7] sm:$0xff]
        %v321 = vld [vmem:[#allocation2 + $0x1af] sm:$0xff]
        %v322 = vld [vmem:[#allocation2 + $0x1c7] sm:$0xff]
        %v323 = vld [vmem:[#allocation2 + $0x1cf] sm:$0xff]
        %v324 = vld [vmem:[#allocation2 + $0x1e7] sm:$0xff]
        %v325 = vld [vmem:[#allocation2 + $0x1ef] sm:$0xff]
        %v326 = vld [vmem:[#allocation2 + $0x207] sm:$0xff]
        %v327 = vld [vmem:[#allocation2 + $0x20f] sm:$0xff]
        %v328 = vld [vmem:[#allocation2 + $0x227] sm:$0xff]
        %v329 = vld [vmem:[#allocation2 + $0x22f] sm:$0xff]
        %v330 = vperm.slane %v181, 0
        %v331 = vmul.f32 %v294, %v330
        %v332 = vmul.f32 %v295, %v330
        %v333 = vmul.f32 %v296, %v330
        %v334 = vmul.f32 %v297, %v330
        %v335 = vmul.f32 %v298, %v330
        %v336 = vmul.f32 %v299, %v330
        %v337 = vmul.f32 %v300, %v330
        %v338 = vmul.f32 %v301, %v330
        %v339 = vmul.f32 %v302, %v330
        %v340 = vmul.f32 %v303, %v330
        %v341 = vmul.f32 %v304, %v330
        %v342 = vmul.f32 %v305, %v330
        %v343 = vmul.f32 %v306, %v330
        %v344 = vmul.f32 %v307, %v330
        %v345 = vmul.f32 %v308, %v330
        %v346 = vmul.f32 %v309, %v330
        %v347 = vmul.f32 %v310, %v330
        %v348 = vmul.f32 %v311, %v330
        %v349 = vmul.f32 %v312, %v330
        %v350 = vmul.f32 %v313, %v330
        %v351 = vmul.f32 %v314, %v330
        %v352 = vmul.f32 %v315, %v330
        %v353 = vmul.f32 %v316, %v330
        %v354 = vmul.f32 %v317, %v330
        %v355 = vmul.f32 %v318, %v330
        %v356 = vmul.f32 %v319, %v330
        %v357 = vmul.f32 %v320, %v330
        %v358 = vmul.f32 %v321, %v330
        %v359 = vmul.f32 %v322, %v330
        %v360 = vmul.f32 %v323, %v330
        %v361 = vmul.f32 %v324, %v330
        %v362 = vmul.f32 %v325, %v330
        %v363 = vperm.slane %v181, 3
        %v364 = vmul.f32 %v296, %v363
        %v365 = vmul.f32 %v297, %v363
        %v366 = vmul.f32 %v298, %v363
        %v367 = vmul.f32 %v299, %v363
        %v368 = vmul.f32 %v300, %v363
        %v369 = vmul.f32 %v301, %v363
        %v370 = vmul.f32 %v302, %v363
        %v371 = vmul.f32 %v303, %v363
        %v372 = vmul.f32 %v304, %v363
        %v373 = vmul.f32 %v305, %v363
        %v374 = vmul.f32 %v306, %v363
        %v375 = vmul.f32 %v307, %v363
        %v376 = vmul.f32 %v308, %v363
        %v377 = vmul.f32 %v309, %v363
        %v378 = vmul.f32 %v310, %v363
        %v379 = vmul.f32 %v311, %v363
        %v380 = vmul.f32 %v312, %v363
        %v381 = vmul.f32 %v313, %v363
        %v382 = vmul.f32 %v314, %v363
        %v383 = vmul.f32 %v315, %v363
        %v384 = vmul.f32 %v316, %v363
        %v385 = vmul.f32 %v317, %v363
        %v386 = vmul.f32 %v318, %v363
        %v387 = vmul.f32 %v319, %v363
        %v388 = vmul.f32 %v320, %v363
        %v389 = vmul.f32 %v321, %v363
        %v390 = vmul.f32 %v322, %v363
        %v391 = vmul.f32 %v323, %v363
        %v392 = vmul.f32 %v324, %v363
        %v393 = vmul.f32 %v325, %v363
        %v394 = vmul.f32 %v326, %v363
        %v395 = vmul.f32 %v327, %v363
        %v396 = vadd.f32 %v331, %v364
        %v397 = vadd.f32 %v332, %v365
        %v398 = vadd.f32 %v333, %v366
        %v399 = vadd.f32 %v334, %v367
        %v400 = vadd.f32 %v335, %v368
        %v401 = vadd.f32 %v336, %v369
        %v402 = vadd.f32 %v337, %v370
        %v403 = vadd.f32 %v338, %v371
        %v404 = vadd.f32 %v339, %v372
        %v405 = vadd.f32 %v340, %v373
        %v406 = vadd.f32 %v341, %v374
        %v407 = vadd.f32 %v342, %v375
        %v408 = vadd.f32 %v343, %v376
        %v409 = vadd.f32 %v344, %v377
        %v410 = vadd.f32 %v345, %v378
        %v411 = vadd.f32 %v346, %v379
        %v412 = vadd.f32 %v347, %v380
        %v413 = vadd.f32 %v348, %v381
        %v414 = vadd.f32 %v349, %v382
        %v415 = vadd.f32 %v350, %v383
        %v416 = vadd.f32 %v351, %v384
        %v417 = vadd.f32 %v352, %v385
        %v418 = vadd.f32 %v353, %v386
        %v419 = vadd.f32 %v354, %v387
        %v420 = vadd.f32 %v355, %v388
        %v421 = vadd.f32 %v356, %v389
        %v422 = vadd.f32 %v357, %v390
        %v423 = vadd.f32 %v358, %v391
        %v424 = vadd.f32 %v359, %v392
        %v425 = vadd.f32 %v360, %v393
        %v426 = vadd.f32 %v361, %v394
        %v427 = vadd.f32 %v362, %v395
        %v428 = vperm.slane %v181, 6
        %v429 = vmul.f32 %v298, %v428
        %v430 = vmul.f32 %v299, %v428
        %v431 = vmul.f32 %v300, %v428
        %v432 = vmul.f32 %v301, %v428
        %v433 = vmul.f32 %v302, %v428
        %v434 = vmul.f32 %v303, %v428
        %v435 = vmul.f32 %v304, %v428
        %v436 = vmul.f32 %v305, %v428
        %v437 = vmul.f32 %v306, %v428
        %v438 = vmul.f32 %v307, %v428
        %v439 = vmul.f32 %v308, %v428
        %v440 = vmul.f32 %v309, %v428
        %v441 = vmul.f32 %v310, %v428
        %v442 = vmul.f32 %v311, %v428
        %v443 = vmul.f32 %v312, %v428
        %v444 = vmul.f32 %v313, %v428
        %v445 = vmul.f32 %v314, %v428
        %v446 = vmul.f32 %v315, %v428
        %v447 = vmul.f32 %v316, %v428
        %v448 = vmul.f32 %v317, %v428
        %v449 = vmul.f32 %v318, %v428
        %v450 = vmul.f32 %v319, %v428
        %v451 = vmul.f32 %v320, %v428
        %v452 = vmul.f32 %v321, %v428
        %v453 = vmul.f32 %v322, %v428
        %v454 = vmul.f32 %v323, %v428
        %v455 = vmul.f32 %v324, %v428
        %v456 = vmul.f32 %v325, %v428
        %v457 = vmul.f32 %v326, %v428
        %v458 = vmul.f32 %v327, %v428
        %v459 = vmul.f32 %v328, %v428
        %v460 = vmul.f32 %v329, %v428
        %v461 = vadd.f32 %v396, %v429
        %v462 = vadd.f32 %v397, %v430
        %v463 = vadd.f32 %v398, %v431
        %v464 = vadd.f32 %v399, %v432
        %v465 = vadd.f32 %v400, %v433
        %v466 = vadd.f32 %v401, %v434
        %v467 = vadd.f32 %v402, %v435
        %v468 = vadd.f32 %v403, %v436
        %v469 = vadd.f32 %v404, %v437
        %v470 = vadd.f32 %v405, %v438
        %v471 = vadd.f32 %v406, %v439
        %v472 = vadd.f32 %v407, %v440
        %v473 = vadd.f32 %v408, %v441
        %v474 = vadd.f32 %v409, %v442
        %v475 = vadd.f32 %v410, %v443
        %v476 = vadd.f32 %v411, %v444
        %v477 = vadd.f32 %v412, %v445
        %v478 = vadd.f32 %v413, %v446
        %v479 = vadd.f32 %v414, %v447
        %v480 = vadd.f32 %v415, %v448
        %v481 = vadd.f32 %v416, %v449
        %v482 = vadd.f32 %v417, %v450
        %v483 = vadd.f32 %v418, %v451
        %v484 = vadd.f32 %v419, %v452
        %v485 = vadd.f32 %v420, %v453
        %v486 = vadd.f32 %v421, %v454
        %v487 = vadd.f32 %v422, %v455
        %v488 = vadd.f32 %v423, %v456
        %v489 = vadd.f32 %v424, %v457
        %v490 = vadd.f32 %v425, %v458
        %v491 = vadd.f32 %v426, %v459
        %v492 = vadd.f32 %v427, %v460
        %v493 = vld [vmem:[#allocation2 + $0x8] sm:$0xff]
        %v494 = vld [vmem:[#allocation2 + $0x10] sm:$0xff]
        %v495 = vld [vmem:[#allocation2 + $0x28] sm:$0xff]
        %v496 = vld [vmem:[#allocation2 + $0x30] sm:$0xff]
        %v497 = vld [vmem:[#allocation2 + $0x48] sm:$0xff]
        %v498 = vld [vmem:[#allocation2 + $0x50] sm:$0xff]
        %v499 = vld [vmem:[#allocation2 + $0x68] sm:$0xff]
        %v500 = vld [vmem:[#allocation2 + $0x70] sm:$0xff]
        %v501 = vld [vmem:[#allocation2 + $0x88] sm:$0xff]
        %v502 = vld [vmem:[#allocation2 + $0x90] sm:$0xff]
        %v503 = vld [vmem:[#allocation2 + $0xa8] sm:$0xff]
        %v504 = vld [vmem:[#allocation2 + $0xb0] sm:$0xff]
        %v505 = vld [vmem:[#allocation2 + $0xc8] sm:$0xff]
        %v506 = vld [vmem:[#allocation2 + $0xd0] sm:$0xff]
        %v507 = vld [vmem:[#allocation2 + $0xe8] sm:$0xff]
        %v508 = vld [vmem:[#allocation2 + $0xf0] sm:$0xff]
        %v509 = vld [vmem:[#allocation2 + $0x108] sm:$0xff]
        %v510 = vld [vmem:[#allocation2 + $0x110] sm:$0xff]
        %v511 = vld [vmem:[#allocation2 + $0x128] sm:$0xff]
        %v512 = vld [vmem:[#allocation2 + $0x130] sm:$0xff]
        %v513 = vld [vmem:[#allocation2 + $0x148] sm:$0xff]
        %v514 = vld [vmem:[#allocation2 + $0x150] sm:$0xff]
        %v515 = vld [vmem:[#allocation2 + $0x168] sm:$0xff]
        %v516 = vld [vmem:[#allocation2 + $0x170] sm:$0xff]
        %v517 = vld [vmem:[#allocation2 + $0x188] sm:$0xff]
        %v518 = vld [vmem:[#allocation2 + $0x190] sm:$0xff]
        %v519 = vld [vmem:[#allocation2 + $0x1a8] sm:$0xff]
        %v520 = vld [vmem:[#allocation2 + $0x1b0] sm:$0xff]
        %v521 = vld [vmem:[#allocation2 + $0x1c8] sm:$0xff]
        %v522 = vld [vmem:[#allocation2 + $0x1d0] sm:$0xff]
        %v523 = vld [vmem:[#allocation2 + $0x1e8] sm:$0xff]
        %v524 = vld [vmem:[#allocation2 + $0x1f0] sm:$0xff]
        %v525 = vld [vmem:[#allocation2 + $0x208] sm:$0xff]
        %v526 = vld [vmem:[#allocation2 + $0x210] sm:$0xff]
        %v527 = vld [vmem:[#allocation2 + $0x228] sm:$0xff]
        %v528 = vld [vmem:[#allocation2 + $0x230] sm:$0xff]
        %v529 = vperm.slane %v181, 1
        %v530 = vmul.f32 %v493, %v529
        %v531 = vmul.f32 %v494, %v529
        %v532 = vmul.f32 %v495, %v529
        %v533 = vmul.f32 %v496, %v529
        %v534 = vmul.f32 %v497, %v529
        %v535 = vmul.f32 %v498, %v529
        %v536 = vmul.f32 %v499, %v529
        %v537 = vmul.f32 %v500, %v529
        %v538 = vmul.f32 %v501, %v529
        %v539 = vmul.f32 %v502, %v529
        %v540 = vmul.f32 %v503, %v529
        %v541 = vmul.f32 %v504, %v529
        %v542 = vmul.f32 %v505, %v529
        %v543 = vmul.f32 %v506, %v529
        %v544 = vmul.f32 %v507, %v529
        %v545 = vmul.f32 %v508, %v529
        %v546 = vmul.f32 %v509, %v529
        %v547 = vmul.f32 %v510, %v529
        %v548 = vmul.f32 %v511, %v529
        %v549 = vmul.f32 %v512, %v529
        %v550 = vmul.f32 %v513, %v529
        %v551 = vmul.f32 %v514, %v529
        %v552 = vmul.f32 %v515, %v529
        %v553 = vmul.f32 %v516, %v529
        %v554 = vmul.f32 %v517, %v529
        %v555 = vmul.f32 %v518, %v529
        %v556 = vmul.f32 %v519, %v529
        %v557 = vmul.f32 %v520, %v529
        %v558 = vmul.f32 %v521, %v529
        %v559 = vmul.f32 %v522, %v529
        %v560 = vmul.f32 %v523, %v529
        %v561 = vmul.f32 %v524, %v529
        %v562 = vadd.f32 %v461, %v530
        %v563 = vadd.f32 %v462, %v531
        %v564 = vadd.f32 %v463, %v532
        %v565 = vadd.f32 %v464, %v533
        %v566 = vadd.f32 %v465, %v534
        %v567 = vadd.f32 %v466, %v535
        %v568 = vadd.f32 %v467, %v536
        %v569 = vadd.f32 %v468, %v537
        %v570 = vadd.f32 %v469, %v538
        %v571 = vadd.f32 %v470, %v539
        %v572 = vadd.f32 %v471, %v540
        %v573 = vadd.f32 %v472, %v541
        %v574 = vadd.f32 %v473, %v542
        %v575 = vadd.f32 %v474, %v543
        %v576 = vadd.f32 %v475, %v544
        %v577 = vadd.f32 %v476, %v545
        %v578 = vadd.f32 %v477, %v546
        %v579 = vadd.f32 %v478, %v547
        %v580 = vadd.f32 %v479, %v548
        %v581 = vadd.f32 %v480, %v549
        %v582 = vadd.f32 %v481, %v550
        %v583 = vadd.f32 %v482, %v551
        %v584 = vadd.f32 %v483, %v552
        %v585 = vadd.f32 %v484, %v553
        %v586 = vadd.f32 %v485, %v554
        %v587 = vadd.f32 %v486, %v555
        %v588 = vadd.f32 %v487, %v556
        %v589 = vadd.f32 %v488, %v557
        %v590 = vadd.f32 %v489, %v558
        %v591 = vadd.f32 %v490, %v559
        %v592 = vadd.f32 %v491, %v560
        %v593 = vadd.f32 %v492, %v561
        %v594 = vperm.slane %v181, 4
        %v595 = vmul.f32 %v495, %v594
        %v596 = vmul.f32 %v496, %v594
        %v597 = vmul.f32 %v497, %v594
        %v598 = vmul.f32 %v498, %v594
        %v599 = vmul.f32 %v499, %v594
        %v600 = vmul.f32 %v500, %v594
        %v601 = vmul.f32 %v501, %v594
        %v602 = vmul.f32 %v502, %v594
        %v603 = vmul.f32 %v503, %v594
        %v604 = vmul.f32 %v504, %v594
        %v605 = vmul.f32 %v505, %v594
        %v606 = vmul.f32 %v506, %v594
        %v607 = vmul.f32 %v507, %v594
        %v608 = vmul.f32 %v508, %v594
        %v609 = vmul.f32 %v509, %v594
        %v610 = vmul.f32 %v510, %v594
        %v611 = vmul.f32 %v511, %v594
        %v612 = vmul.f32 %v512, %v594
        %v613 = vmul.f32 %v513, %v594
        %v614 = vmul.f32 %v514, %v594
        %v615 = vmul.f32 %v515, %v594
        %v616 = vmul.f32 %v516, %v594
        %v617 = vmul.f32 %v517, %v594
        %v618 = vmul.f32 %v518, %v594
        %v619 = vmul.f32 %v519, %v594
        %v620 = vmul.f32 %v520, %v594
        %v621 = vmul.f32 %v521, %v594
        %v622 = vmul.f32 %v522, %v594
        %v623 = vmul.f32 %v523, %v594
        %v624 = vmul.f32 %v524, %v594
        %v625 = vmul.f32 %v525, %v594
        %v626 = vmul.f32 %v526, %v594
        %v627 = vadd.f32 %v562, %v595
        %v628 = vadd.f32 %v563, %v596
        %v629 = vadd.f32 %v564, %v597
        %v630 = vadd.f32 %v565, %v598
        %v631 = vadd.f32 %v566, %v599
        %v632 = vadd.f32 %v567, %v600
        %v633 = vadd.f32 %v568, %v601
        %v634 = vadd.f32 %v569, %v602
        %v635 = vadd.f32 %v570, %v603
        %v636 = vadd.f32 %v571, %v604
        %v637 = vadd.f32 %v572, %v605
        %v638 = vadd.f32 %v573, %v606
        %v639 = vadd.f32 %v574, %v607
        %v640 = vadd.f32 %v575, %v608
        %v641 = vadd.f32 %v576, %v609
        %v642 = vadd.f32 %v577, %v610
        %v643 = vadd.f32 %v578, %v611
        %v644 = vadd.f32 %v579, %v612
        %v645 = vadd.f32 %v580, %v613
        %v646 = vadd.f32 %v581, %v614
        %v647 = vadd.f32 %v582, %v615
        %v648 = vadd.f32 %v583, %v616
        %v649 = vadd.f32 %v584, %v617
        %v650 = vadd.f32 %v585, %v618
        %v651 = vadd.f32 %v586, %v619
        %v652 = vadd.f32 %v587, %v620
        %v653 = vadd.f32 %v588, %v621
        %v654 = vadd.f32 %v589, %v622
        %v655 = vadd.f32 %v590, %v623
        %v656 = vadd.f32 %v591, %v624
        %v657 = vadd.f32 %v592, %v625
        %v658 = vadd.f32 %v593, %v626
        %v659 = vperm.slane %v181, 7
        %v660 = vmul.f32 %v497, %v659
        %v661 = vmul.f32 %v498, %v659
        %v662 = vmul.f32 %v499, %v659
        %v663 = vmul.f32 %v500, %v659
        %v664 = vmul.f32 %v501, %v659
        %v665 = vmul.f32 %v502, %v659
        %v666 = vmul.f32 %v503, %v659
        %v667 = vmul.f32 %v504, %v659
        %v668 = vmul.f32 %v505, %v659
        %v669 = vmul.f32 %v506, %v659
        %v670 = vmul.f32 %v507, %v659
        %v671 = vmul.f32 %v508, %v659
        %v672 = vmul.f32 %v509, %v659
        %v673 = vmul.f32 %v510, %v659
        %v674 = vmul.f32 %v511, %v659
        %v675 = vmul.f32 %v512, %v659
        %v676 = vmul.f32 %v513, %v659
        %v677 = vmul.f32 %v514, %v659
        %v678 = vmul.f32 %v515, %v659
        %v679 = vmul.f32 %v516, %v659
        %v680 = vmul.f32 %v517, %v659
        %v681 = vmul.f32 %v518, %v659
        %v682 = vmul.f32 %v519, %v659
        %v683 = vmul.f32 %v520, %v659
        %v684 = vmul.f32 %v521, %v659
        %v685 = vmul.f32 %v522, %v659
        %v686 = vmul.f32 %v523, %v659
        %v687 = vmul.f32 %v524, %v659
        %v688 = vmul.f32 %v525, %v659
        %v689 = vmul.f32 %v526, %v659
        %v690 = vmul.f32 %v527, %v659
        %v691 = vmul.f32 %v528, %v659
        %v692 = vadd.f32 %v627, %v660
        %v693 = vadd.f32 %v628, %v661
        %v694 = vadd.f32 %v629, %v662
        %v695 = vadd.f32 %v630, %v663
        %v696 = vadd.f32 %v631, %v664
        %v697 = vadd.f32 %v632, %v665
        %v698 = vadd.f32 %v633, %v666
        %v699 = vadd.f32 %v634, %v667
        %v700 = vadd.f32 %v635, %v668
        %v701 = vadd.f32 %v636, %v669
        %v702 = vadd.f32 %v637, %v670
        %v703 = vadd.f32 %v638, %v671
        %v704 = vadd.f32 %v639, %v672
        %v705 = vadd.f32 %v640, %v673
        %v706 = vadd.f32 %v641, %v674
        %v707 = vadd.f32 %v642, %v675
        %v708 = vadd.f32 %v643, %v676
        %v709 = vadd.f32 %v644, %v677
        %v710 = vadd.f32 %v645, %v678
        %v711 = vadd.f32 %v646, %v679
        %v712 = vadd.f32 %v647, %v680
        %v713 = vadd.f32 %v648, %v681
        %v714 = vadd.f32 %v649, %v682
        %v715 = vadd.f32 %v650, %v683
        %v716 = vadd.f32 %v651, %v684
        %v717 = vadd.f32 %v652, %v685
        %v718 = vadd.f32 %v653, %v686
        %v719 = vadd.f32 %v654, %v687
        %v720 = vadd.f32 %v655, %v688
        %v721 = vadd.f32 %v656, %v689
        %v722 = vadd.f32 %v657, %v690
        %v723 = vadd.f32 %v658, %v691
        %v724 = vld [vmem:[#allocation2 + $0x9] sm:$0xff]
        %v725 = vld [vmem:[#allocation2 + $0x11] sm:$0xff]
        %v726 = vld [vmem:[#allocation2 + $0x29] sm:$0xff]
        %v727 = vld [vmem:[#allocation2 + $0x31] sm:$0xff]
        %v728 = vld [vmem:[#allocation2 + $0x49] sm:$0xff]
        %v729 = vld [vmem:[#allocation2 + $0x51] sm:$0xff]
        %v730 = vld [vmem:[#allocation2 + $0x69] sm:$0xff]
        %v731 = vld [vmem:[#allocation2 + $0x71] sm:$0xff]
        %v732 = vld [vmem:[#allocation2 + $0x89] sm:$0xff]
        %v733 = vld [vmem:[#allocation2 + $0x91] sm:$0xff]
        %v734 = vld [vmem:[#allocation2 + $0xa9] sm:$0xff]
        %v735 = vld [vmem:[#allocation2 + $0xb1] sm:$0xff]
        %v736 = vld [vmem:[#allocation2 + $0xc9] sm:$0xff]
        %v737 = vld [vmem:[#allocation2 + $0xd1] sm:$0xff]
        %v738 = vld [vmem:[#allocation2 + $0xe9] sm:$0xff]
        %v739 = vld [vmem:[#allocation2 + $0xf1] sm:$0xff]
        %v740 = vld [vmem:[#allocation2 + $0x109] sm:$0xff]
        %v741 = vld [vmem:[#allocation2 + $0x111] sm:$0xff]
        %v742 = vld [vmem:[#allocation2 + $0x129] sm:$0xff]
        %v743 = vld [vmem:[#allocation2 + $0x131] sm:$0xff]
        %v744 = vld [vmem:[#allocation2 + $0x149] sm:$0xff]
        %v745 = vld [vmem:[#allocation2 + $0x151] sm:$0xff]
        %v746 = vld [vmem:[#allocation2 + $0x169] sm:$0xff]
        %v747 = vld [vmem:[#allocation2 + $0x171] sm:$0xff]
        %v748 = vld [vmem:[#allocation2 + $0x189] sm:$0xff]
        %v749 = vld [vmem:[#allocation2 + $0x191] sm:$0xff]
        %v750 = vld [vmem:[#allocation2 + $0x1a9] sm:$0xff]
        %v751 = vld [vmem:[#allocation2 + $0x1b1] sm:$0xff]
        %v752 = vld [vmem:[#allocation2 + $0x1c9] sm:$0xff]
        %v753 = vld [vmem:[#allocation2 + $0x1d1] sm:$0xff]
        %v754 = vld [vmem:[#allocation2 + $0x1e9] sm:$0xff]
        %v755 = vld [vmem:[#allocation2 + $0x1f1] sm:$0xff]
        %v756 = vld [vmem:[#allocation2 + $0x209] sm:$0xff]
        %v757 = vld [vmem:[#allocation2 + $0x211] sm:$0xff]
        %v758 = vld [vmem:[#allocation2 + $0x229] sm:$0xff]
        %v759 = vld [vmem:[#allocation2 + $0x231] sm:$0xff]
        %v760 = vperm.slane %v181, 2
        %v761 = vmul.f32 %v724, %v760
        %v762 = vmul.f32 %v725, %v760
        %v763 = vmul.f32 %v726, %v760
        %v764 = vmul.f32 %v727, %v760
        %v765 = vmul.f32 %v728, %v760
        %v766 = vmul.f32 %v729, %v760
        %v767 = vmul.f32 %v730, %v760
        %v768 = vmul.f32 %v731, %v760
        %v769 = vmul.f32 %v732, %v760
        %v770 = vmul.f32 %v733, %v760
        %v771 = vmul.f32 %v734, %v760
        %v772 = vmul.f32 %v735, %v760
        %v773 = vmul.f32 %v736, %v760
        %v774 = vmul.f32 %v737, %v760
        %v775 = vmul.f32 %v738, %v760
        %v776 = vmul.f32 %v739, %v760
        %v777 = vmul.f32 %v740, %v760
        %v778 = vmul.f32 %v741, %v760
        %v779 = vmul.f32 %v742, %v760
        %v780 = vmul.f32 %v743, %v760
        %v781 = vmul.f32 %v744, %v760
        %v782 = vmul.f32 %v745, %v760
        %v783 = vmul.f32 %v746, %v760
        %v784 = vmul.f32 %v747, %v760
        %v785 = vmul.f32 %v748, %v760
        %v786 = vmul.f32 %v749, %v760
        %v787 = vmul.f32 %v750, %v760
        %v788 = vmul.f32 %v751, %v760
        %v789 = vmul.f32 %v752, %v760
        %v790 = vmul.f32 %v753, %v760
        %v791 = vmul.f32 %v754, %v760
        %v792 = vmul.f32 %v755, %v760
        %v793 = vadd.f32 %v692, %v761
        %v794 = vadd.f32 %v693, %v762
        %v795 = vadd.f32 %v694, %v763
        %v796 = vadd.f32 %v695, %v764
        %v797 = vadd.f32 %v696, %v765
        %v798 = vadd.f32 %v697, %v766
        %v799 = vadd.f32 %v698, %v767
        %v800 = vadd.f32 %v699, %v768
        %v801 = vadd.f32 %v700, %v769
        %v802 = vadd.f32 %v701, %v770
        %v803 = vadd.f32 %v702, %v771
        %v804 = vadd.f32 %v703, %v772
        %v805 = vadd.f32 %v704, %v773
        %v806 = vadd.f32 %v705, %v774
        %v807 = vadd.f32 %v706, %v775
        %v808 = vadd.f32 %v707, %v776
        %v809 = vadd.f32 %v708, %v777
        %v810 = vadd.f32 %v709, %v778
        %v811 = vadd.f32 %v710, %v779
        %v812 = vadd.f32 %v711, %v780
        %v813 = vadd.f32 %v712, %v781
        %v814 = vadd.f32 %v713, %v782
        %v815 = vadd.f32 %v714, %v783
        %v816 = vadd.f32 %v715, %v784
        %v817 = vadd.f32 %v716, %v785
        %v818 = vadd.f32 %v717, %v786
        %v819 = vadd.f32 %v718, %v787
        %v820 = vadd.f32 %v719, %v788
        %v821 = vadd.f32 %v720, %v789
        %v822 = vadd.f32 %v721, %v790
        %v823 = vadd.f32 %v722, %v791
        %v824 = vadd.f32 %v723, %v792
        %v825 = vperm.slane %v181, 5
        %v826 = vmul.f32 %v726, %v825
        %v827 = vmul.f32 %v727, %v825
        %v828 = vmul.f32 %v728, %v825
        %v829 = vmul.f32 %v729, %v825
        %v830 = vmul.f32 %v730, %v825
        %v831 = vmul.f32 %v731, %v825
        %v832 = vmul.f32 %v732, %v825
        %v833 = vmul.f32 %v733, %v825
        %v834 = vmul.f32 %v734, %v825
        %v835 = vmul.f32 %v735, %v825
        %v836 = vmul.f32 %v736, %v825
        %v837 = vmul.f32 %v737, %v825
        %v838 = vmul.f32 %v738, %v825
        %v839 = vmul.f32 %v739, %v825
        %v840 = vmul.f32 %v740, %v825
        %v841 = vmul.f32 %v741, %v825
        %v842 = vmul.f32 %v742, %v825
        %v843 = vmul.f32 %v743, %v825
        %v844 = vmul.f32 %v744, %v825
        %v845 = vmul.f32 %v745, %v825
        %v846 = vmul.f32 %v746, %v825
        %v847 = vmul.f32 %v747, %v825
        %v848 = vmul.f32 %v748, %v825
        %v849 = vmul.f32 %v749, %v825
        %v850 = vmul.f32 %v750, %v825
        %v851 = vmul.f32 %v751, %v825
        %v852 = vmul.f32 %v752, %v825
        %v853 = vmul.f32 %v753, %v825
        %v854 = vmul.f32 %v754, %v825
        %v855 = vmul.f32 %v755, %v825
        %v856 = vmul.f32 %v756, %v825
        %v857 = vmul.f32 %v757, %v825
        %v858 = vadd.f32 %v793, %v826
        %v859 = vadd.f32 %v794, %v827
        %v860 = vadd.f32 %v795, %v828
        %v861 = vadd.f32 %v796, %v829
        %v862 = vadd.f32 %v797, %v830
        %v863 = vadd.f32 %v798, %v831
        %v864 = vadd.f32 %v799, %v832
        %v865 = vadd.f32 %v800, %v833
        %v866 = vadd.f32 %v801, %v834
        %v867 = vadd.f32 %v802, %v835
        %v868 = vadd.f32 %v803, %v836
        %v869 = vadd.f32 %v804, %v837
        %v870 = vadd.f32 %v805, %v838
        %v871 = vadd.f32 %v806, %v839
        %v872 = vadd.f32 %v807, %v840
        %v873 = vadd.f32 %v808, %v841
        %v874 = vadd.f32 %v809, %v842
        %v875 = vadd.f32 %v810, %v843
        %v876 = vadd.f32 %v811, %v844
        %v877 = vadd.f32 %v812, %v845
        %v878 = vadd.f32 %v813, %v846
        %v879 = vadd.f32 %v814, %v847
        %v880 = vadd.f32 %v815, %v848
        %v881 = vadd.f32 %v816, %v849
        %v882 = vadd.f32 %v817, %v850
        %v883 = vadd.f32 %v818, %v851
        %v884 = vadd.f32 %v819, %v852
        %v885 = vadd.f32 %v820, %v853
        %v886 = vadd.f32 %v821, %v854
        %v887 = vadd.f32 %v822, %v855
        %v888 = vadd.f32 %v823, %v856
        %v889 = vadd.f32 %v824, %v857
        %v890 = vperm.slane %v182, 0
        %v891 = vmul.f32 %v728, %v890
        %v892 = vmul.f32 %v729, %v890
        %v893 = vmul.f32 %v730, %v890
        %v894 = vmul.f32 %v731, %v890
        %v895 = vmul.f32 %v732, %v890
        %v896 = vmul.f32 %v733, %v890
        %v897 = vmul.f32 %v734, %v890
        %v898 = vmul.f32 %v735, %v890
        %v899 = vmul.f32 %v736, %v890
        %v900 = vmul.f32 %v737, %v890
        %v901 = vmul.f32 %v738, %v890
        %v902 = vmul.f32 %v739, %v890
        %v903 = vmul.f32 %v740, %v890
        %v904 = vmul.f32 %v741, %v890
        %v905 = vmul.f32 %v742, %v890
        %v906 = vmul.f32 %v743, %v890
        %v907 = vmul.f32 %v744, %v890
        %v908 = vmul.f32 %v745, %v890
        %v909 = vmul.f32 %v746, %v890
        %v910 = vmul.f32 %v747, %v890
        %v911 = vmul.f32 %v748, %v890
        %v912 = vmul.f32 %v749, %v890
        %v913 = vmul.f32 %v750, %v890
        %v914 = vmul.f32 %v751, %v890
        %v915 = vmul.f32 %v752, %v890
        %v916 = vmul.f32 %v753, %v890
        %v917 = vmul.f32 %v754, %v890
        %v918 = vmul.f32 %v755, %v890
        %v919 = vmul.f32 %v756, %v890
        %v920 = vmul.f32 %v757, %v890
        %v921 = vmul.f32 %v758, %v890
        %v922 = vmul.f32 %v759, %v890
        %v923 = vadd.f32 %v858, %v891
        %v924 = vadd.f32 %v859, %v892
        %v925 = vadd.f32 %v860, %v893
        %v926 = vadd.f32 %v861, %v894
        %v927 = vadd.f32 %v862, %v895
        %v928 = vadd.f32 %v863, %v896
        %v929 = vadd.f32 %v864, %v897
        %v930 = vadd.f32 %v865, %v898
        %v931 = vadd.f32 %v866, %v899
        %v932 = vadd.f32 %v867, %v900
        %v933 = vadd.f32 %v868, %v901
        %v934 = vadd.f32 %v869, %v902
        %v935 = vadd.f32 %v870, %v903
        %v936 = vadd.f32 %v871, %v904
        %v937 = vadd.f32 %v872, %v905
        %v938 = vadd.f32 %v873, %v906
        %v939 = vadd.f32 %v874, %v907
        %v940 = vadd.f32 %v875, %v908
        %v941 = vadd.f32 %v876, %v909
        %v942 = vadd.f32 %v877, %v910
        %v943 = vadd.f32 %v878, %v911
        %v944 = vadd.f32 %v879, %v912
        %v945 = vadd.f32 %v880, %v913
        %v946 = vadd.f32 %v881, %v914
        %v947 = vadd.f32 %v882, %v915
        %v948 = vadd.f32 %v883, %v916
        %v949 = vadd.f32 %v884, %v917
        %v950 = vadd.f32 %v885, %v918
        %v951 = vadd.f32 %v886, %v919
        %v952 = vadd.f32 %v887, %v920
        %v953 = vadd.f32 %v888, %v921
        %v954 = vadd.f32 %v889, %v922
        %v955 = vperm.slane %v183, 2
        %v956 = vadd.f32 %v923, %v955
        %v957 = vadd.f32 %v924, %v955
        %v958 = vadd.f32 %v925, %v955
        %v959 = vadd.f32 %v926, %v955
        %v960 = vadd.f32 %v927, %v955
        %v961 = vadd.f32 %v928, %v955
        %v962 = vadd.f32 %v929, %v955
        %v963 = vadd.f32 %v930, %v955
        %v964 = vadd.f32 %v931, %v955
        %v965 = vadd.f32 %v932, %v955
        %v966 = vadd.f32 %v933, %v955
        %v967 = vadd.f32 %v934, %v955
        %v968 = vadd.f32 %v935, %v955
        %v969 = vadd.f32 %v936, %v955
        %v970 = vadd.f32 %v937, %v955
        %v971 = vadd.f32 %v938, %v955
        %v972 = vadd.f32 %v939, %v955
        %v973 = vadd.f32 %v940, %v955
        %v974 = vadd.f32 %v941, %v955
        %v975 = vadd.f32 %v942, %v955
        %v976 = vadd.f32 %v943, %v955
        %v977 = vadd.f32 %v944, %v955
        %v978 = vadd.f32 %v945, %v955
        %v979 = vadd.f32 %v946, %v955
        %v980 = vadd.f32 %v947, %v955
        %v981 = vadd.f32 %v948, %v955
        %v982 = vadd.f32 %v949, %v955
        %v983 = vadd.f32 %v950, %v955
        %v984 = vadd.f32 %v951, %v955
        %v985 = vadd.f32 %v952, %v955
        %v986 = vadd.f32 %v953, %v955
        %v987 = vadd.f32 %v954, %v955
        %v988 = vmul.f32 %v956, 0.5
        %v989 = vmul.f32 %v957, 0.5
        %v990 = vmul.f32 %v958, 0.5
        %v991 = vmul.f32 %v959, 0.5
        %v992 = vmul.f32 %v960, 0.5
        %v993 = vmul.f32 %v961, 0.5
        %v994 = vmul.f32 %v962, 0.5
        %v995 = vmul.f32 %v963, 0.5
        %v996 = vmul.f32 %v964, 0.5
        %v997 = vmul.f32 %v965, 0.5
        %v998 = vmul.f32 %v966, 0.5
        %v999 = vmul.f32 %v967, 0.5
        %v1000 = vmul.f32 %v968, 0.5
        %v1001 = vmul.f32 %v969, 0.5
        %v1002 = vmul.f32 %v970, 0.5
        %v1003 = vmul.f32 %v971, 0.5
        %v1004 = vmul.f32 %v972, 0.5
        %v1005 = vmul.f32 %v973, 0.5
        %v1006 = vmul.f32 %v974, 0.5
        %v1007 = vmul.f32 %v975, 0.5
        %v1008 = vmul.f32 %v976, 0.5
        %v1009 = vmul.f32 %v977, 0.5
        %v1010 = vmul.f32 %v978, 0.5
        %v1011 = vmul.f32 %v979, 0.5
        %v1012 = vmul.f32 %v980, 0.5
        %v1013 = vmul.f32 %v981, 0.5
        %v1014 = vmul.f32 %v982, 0.5
        %v1015 = vmul.f32 %v983, 0.5
        %v1016 = vmul.f32 %v984, 0.5
        %v1017 = vmul.f32 %v985, 0.5
        %v1018 = vmul.f32 %v986, 0.5
        %v1019 = vmul.f32 %v987, 0.5
        %v1020 = vmul.f32 %v956, 0.044715
        %v1021 = vmul.f32 %v957, 0.044715
        %v1022 = vmul.f32 %v958, 0.044715
        %v1023 = vmul.f32 %v959, 0.044715
        %v1024 = vmul.f32 %v960, 0.044715
        %v1025 = vmul.f32 %v961, 0.044715
        %v1026 = vmul.f32 %v962, 0.044715
        %v1027 = vmul.f32 %v963, 0.044715
        %v1028 = vmul.f32 %v964, 0.044715
        %v1029 = vmul.f32 %v965, 0.044715
        %v1030 = vmul.f32 %v966, 0.044715
        %v1031 = vmul.f32 %v967, 0.044715
        %v1032 = vmul.f32 %v968, 0.044715
        %v1033 = vmul.f32 %v969, 0.044715
        %v1034 = vmul.f32 %v970, 0.044715
        %v1035 = vmul.f32 %v971, 0.044715
        %v1036 = vmul.f32 %v972, 0.044715
        %v1037 = vmul.f32 %v973, 0.044715
        %v1038 = vmul.f32 %v974, 0.044715
        %v1039 = vmul.f32 %v975, 0.044715
        %v1040 = vmul.f32 %v976, 0.044715
        %v1041 = vmul.f32 %v977, 0.044715
        %v1042 = vmul.f32 %v978, 0.044715
        %v1043 = vmul.f32 %v979, 0.044715
        %v1044 = vmul.f32 %v980, 0.044715
        %v1045 = vmul.f32 %v981, 0.044715
        %v1046 = vmul.f32 %v982, 0.044715
        %v1047 = vmul.f32 %v983, 0.044715
        %v1048 = vmul.f32 %v984, 0.044715
        %v1049 = vmul.f32 %v985, 0.044715
        %v1050 = vmul.f32 %v986, 0.044715
        %v1051 = vmul.f32 %v987, 0.044715
        %v1052 = vmul.f32 %v1020, %v956
        %v1053 = vmul.f32 %v1021, %v957
        %v1054 = vmul.f32 %v1022, %v958
        %v1055 = vmul.f32 %v1023, %v959
        %v1056 = vmul.f32 %v1024, %v960
        %v1057 = vmul.f32 %v1025, %v961
        %v1058 = vmul.f32 %v1026, %v962
        %v1059 = vmul.f32 %v1027, %v963
        %v1060 = vmul.f32 %v1028, %v964
        %v1061 = vmul.f32 %v1029, %v965
        %v1062 = vmul.f32 %v1030, %v966
        %v1063 = vmul.f32 %v1031, %v967
        %v1064 = vmul.f32 %v1032, %v968
        %v1065 = vmul.f32 %v1033, %v969
        %v1066 = vmul.f32 %v1034, %v970
        %v1067 = vmul.f32 %v1035, %v971
        %v1068 = vmul.f32 %v1036, %v972
        %v1069 = vmul.f32 %v1037, %v973
        %v1070 = vmul.f32 %v1038, %v974
        %v1071 = vmul.f32 %v1039, %v975
        %v1072 = vmul.f32 %v1040, %v976
        %v1073 = vmul.f32 %v1041, %v977
        %v1074 = vmul.f32 %v1042, %v978
        %v1075 = vmul.f32 %v1043, %v979
        %v1076 = vmul.f32 %v1044, %v980
        %v1077 = vmul.f32 %v1045, %v981
        %v1078 = vmul.f32 %v1046, %v982
        %v1079 = vmul.f32 %v1047, %v983
        %v1080 = vmul.f32 %v1048, %v984
        %v1081 = vmul.f32 %v1049, %v985
        %v1082 = vmul.f32 %v1050, %v986
        %v1083 = vmul.f32 %v1051, %v987
        %v1084 = vmul.f32 %v1052, %v956
        %v1085 = vmul.f32 %v1053, %v957
        %v1086 = vmul.f32 %v1054, %v958
        %v1087 = vmul.f32 %v1055, %v959
        %v1088 = vmul.f32 %v1056, %v960
        %v1089 = vmul.f32 %v1057, %v961
        %v1090 = vmul.f32 %v1058, %v962
        %v1091 = vmul.f32 %v1059, %v963
        %v1092 = vmul.f32 %v1060, %v964
        %v1093 = vmul.f32 %v1061, %v965
        %v1094 = vmul.f32 %v1062, %v966
        %v1095 = vmul.f32 %v1063, %v967
        %v1096 = vmul.f32 %v1064, %v968
        %v1097 = vmul.f32 %v1065, %v969
        %v1098 = vmul.f32 %v1066, %v970
        %v1099 = vmul.f32 %v1067, %v971
        %v1100 = vmul.f32 %v1068, %v972
        %v1101 = vmul.f32 %v1069, %v973
        %v1102 = vmul.f32 %v1070, %v974
        %v1103 = vmul.f32 %v1071, %v975
        %v1104 = vmul.f32 %v1072, %v976
        %v1105 = vmul.f32 %v1073, %v977
        %v1106 = vmul.f32 %v1074, %v978
        %v1107 = vmul.f32 %v1075, %v979
        %v1108 = vmul.f32 %v1076, %v980
        %v1109 = vmul.f32 %v1077, %v981
        %v1110 = vmul.f32 %v1078, %v982
        %v1111 = vmul.f32 %v1079, %v983
        %v1112 = vmul.f32 %v1080, %v984
        %v1113 = vmul.f32 %v1081, %v985
        %v1114 = vmul.f32 %v1082, %v986
        %v1115 = vmul.f32 %v1083, %v987
        %v1116 = vadd.f32 %v956, %v1084
        %v1117 = vadd.f32 %v957, %v1085
        %v1118 = vadd.f32 %v958, %v1086
        %v1119 = vadd.f32 %v959, %v1087
        %v1120 = vadd.f32 %v960, %v1088
        %v1121 = vadd.f32 %v961, %v1089
        %v1122 = vadd.f32 %v962, %v1090
        %v1123 = vadd.f32 %v963, %v1091
        %v1124 = vadd.f32 %v964, %v1092
        %v1125 = vadd.f32 %v965, %v1093
        %v1126 = vadd.f32 %v966, %v1094
        %v1127 = vadd.f32 %v967, %v1095
        %v1128 = vadd.f32 %v968, %v1096
        %v1129 = vadd.f32 %v969, %v1097
        %v1130 = vadd.f32 %v970, %v1098
        %v1131 = vadd.f32 %v971, %v1099
        %v1132 = vadd.f32 %v972, %v1100
        %v1133 = vadd.f32 %v973, %v1101
        %v1134 = vadd.f32 %v974, %v1102
        %v1135 = vadd.f32 %v975, %v1103
        %v1136 = vadd.f32 %v976, %v1104
        %v1137 = vadd.f32 %v977, %v1105
        %v1138 = vadd.f32 %v978, %v1106
        %v1139 = vadd.f32 %v979, %v1107
        %v1140 = vadd.f32 %v980, %v1108
        %v1141 = vadd.f32 %v981, %v1109
        %v1142 = vadd.f32 %v982, %v1110
        %v1143 = vadd.f32 %v983, %v1111
        %v1144 = vadd.f32 %v984, %v1112
        %v1145 = vadd.f32 %v985, %v1113
        %v1146 = vadd.f32 %v986, %v1114
        %v1147 = vadd.f32 %v987, %v1115
        %v1148 = vmul.f32 %v1116, 0.7978846
        %v1149 = vmul.f32 %v1117, 0.7978846
        %v1150 = vmul.f32 %v1118, 0.7978846
        %v1151 = vmul.f32 %v1119, 0.7978846
        %v1152 = vmul.f32 %v1120, 0.7978846
        %v1153 = vmul.f32 %v1121, 0.7978846
        %v1154 = vmul.f32 %v1122, 0.7978846
        %v1155 = vmul.f32 %v1123, 0.7978846
        %v1156 = vmul.f32 %v1124, 0.7978846
        %v1157 = vmul.f32 %v1125, 0.7978846
        %v1158 = vmul.f32 %v1126, 0.7978846
        %v1159 = vmul.f32 %v1127, 0.7978846
        %v1160 = vmul.f32 %v1128, 0.7978846
        %v1161 = vmul.f32 %v1129, 0.7978846
        %v1162 = vmul.f32 %v1130, 0.7978846
        %v1163 = vmul.f32 %v1131, 0.7978846
        %v1164 = vmul.f32 %v1132, 0.7978846
        %v1165 = vmul.f32 %v1133, 0.7978846
        %v1166 = vmul.f32 %v1134, 0.7978846
        %v1167 = vmul.f32 %v1135, 0.7978846
        %v1168 = vmul.f32 %v1136, 0.7978846
        %v1169 = vmul.f32 %v1137, 0.7978846
        %v1170 = vmul.f32 %v1138, 0.7978846
        %v1171 = vmul.f32 %v1139, 0.7978846
        %v1172 = vmul.f32 %v1140, 0.7978846
        %v1173 = vmul.f32 %v1141, 0.7978846
        %v1174 = vmul.f32 %v1142, 0.7978846
        %v1175 = vmul.f32 %v1143, 0.7978846
        %v1176 = vmul.f32 %v1144, 0.7978846
        %v1177 = vmul.f32 %v1145, 0.7978846
        %v1178 = vmul.f32 %v1146, 0.7978846
        %v1179 = vmul.f32 %v1147, 0.7978846
        %v1180 = vtanh.pop %v1148
        %v1181 = vtanh.pop %v1149
        %v1182 = vtanh.pop %v1150
        %v1183 = vtanh.pop %v1151
        %v1184 = vtanh.pop %v1152
        %v1185 = vtanh.pop %v1153
        %v1186 = vtanh.pop %v1154
        %v1187 = vtanh.pop %v1155
        %v1188 = vtanh.pop %v1156
        %v1189 = vtanh.pop %v1157
        %v1190 = vtanh.pop %v1158
        %v1191 = vtanh.pop %v1159
        %v1192 = vtanh.pop %v1160
        %v1193 = vtanh.pop %v1161
        %v1194 = vtanh.pop %v1162
        %v1195 = vtanh.pop %v1163
        %v1196 = vtanh.pop %v1164
        %v1197 = vtanh.pop %v1165
        %v1198 = vtanh.pop %v1166
        %v1199 = vtanh.pop %v1167
        %v1200 = vtanh.pop %v1168
        %v1201 = vtanh.pop %v1169
        %v1202 = vtanh.pop %v1170
        %v1203 = vtanh.pop %v1171
        %v1204 = vtanh.pop %v1172
        %v1205 = vtanh.pop %v1173
        %v1206 = vtanh.pop %v1174
        %v1207 = vtanh.pop %v1175
        %v1208 = vtanh.pop %v1176
        %v1209 = vtanh.pop %v1177
        %v1210 = vtanh.pop %v1178
        %v1211 = vtanh.pop %v1179
        %v1212 = vadd.f32 %v1180, 1.0
        %v1213 = vadd.f32 %v1181, 1.0
        %v1214 = vadd.f32 %v1182, 1.0
        %v1215 = vadd.f32 %v1183, 1.0
        %v1216 = vadd.f32 %v1184, 1.0
        %v1217 = vadd.f32 %v1185, 1.0
        %v1218 = vadd.f32 %v1186, 1.0
        %v1219 = vadd.f32 %v1187, 1.0
        %v1220 = vadd.f32 %v1188, 1.0
        %v1221 = vadd.f32 %v1189, 1.0
        %v1222 = vadd.f32 %v1190, 1.0
        %v1223 = vadd.f32 %v1191, 1.0
        %v1224 = vadd.f32 %v1192, 1.0
        %v1225 = vadd.f32 %v1193, 1.0
        %v1226 = vadd.f32 %v1194, 1.0
        %v1227 = vadd.f32 %v1195, 1.0
        %v1228 = vadd.f32 %v1196, 1.0
        %v1229 = vadd.f32 %v1197, 1.0
        %v1230 = vadd.f32 %v1198, 1.0
        %v1231 = vadd.f32 %v1199, 1.0
        %v1232 = vadd.f32 %v1200, 1.0
        %v1233 = vadd.f32 %v1201, 1.0
        %v1234 = vadd.f32 %v1202, 1.0
        %v1235 = vadd.f32 %v1203, 1.0
        %v1236 = vadd.f32 %v1204, 1.0
        %v1237 = vadd.f32 %v1205, 1.0
        %v1238 = vadd.f32 %v1206, 1.0
        %v1239 = vadd.f32 %v1207, 1.0
        %v1240 = vadd.f32 %v1208, 1.0
        %v1241 = vadd.f32 %v1209, 1.0
        %v1242 = vadd.f32 %v1210, 1.0
        %v1243 = vadd.f32 %v1211, 1.0
        %v1244 = vmul.f32 %v988, %v1212
        %v1245 = vmul.f32 %v989, %v1213
        %v1246 = vmul.f32 %v990, %v1214
        %v1247 = vmul.f32 %v991, %v1215
        %v1248 = vmul.f32 %v992, %v1216
        %v1249 = vmul.f32 %v993, %v1217
        %v1250 = vmul.f32 %v994, %v1218
        %v1251 = vmul.f32 %v995, %v1219
        %v1252 = vmul.f32 %v996, %v1220
        %v1253 = vmul.f32 %v997, %v1221
        %v1254 = vmul.f32 %v998, %v1222
        %v1255 = vmul.f32 %v999, %v1223
        %v1256 = vmul.f32 %v1000, %v1224
        %v1257 = vmul.f32 %v1001, %v1225
        %v1258 = vmul.f32 %v1002, %v1226
        %v1259 = vmul.f32 %v1003, %v1227
        %v1260 = vmul.f32 %v1004, %v1228
        %v1261 = vmul.f32 %v1005, %v1229
        %v1262 = vmul.f32 %v1006, %v1230
        %v1263 = vmul.f32 %v1007, %v1231
        %v1264 = vmul.f32 %v1008, %v1232
        %v1265 = vmul.f32 %v1009, %v1233
        %v1266 = vmul.f32 %v1010, %v1234
        %v1267 = vmul.f32 %v1011, %v1235
        %v1268 = vmul.f32 %v1012, %v1236
        %v1269 = vmul.f32 %v1013, %v1237
        %v1270 = vmul.f32 %v1014, %v1238
        %v1271 = vmul.f32 %v1015, %v1239
        %v1272 = vmul.f32 %v1016, %v1240
        %v1273 = vmul.f32 %v1017, %v1241
        %v1274 = vmul.f32 %v1018, %v1242
        %v1275 = vmul.f32 %v1019, %v1243
        %v1276 = vperm.slane %v183, 4
        %v1277 = vmul.f32 %v1244, %v1276
        %v1278 = vmul.f32 %v1245, %v1276
        %v1279 = vmul.f32 %v1246, %v1276
        %v1280 = vmul.f32 %v1247, %v1276
        %v1281 = vmul.f32 %v1248, %v1276
        %v1282 = vmul.f32 %v1249, %v1276
        %v1283 = vmul.f32 %v1250, %v1276
        %v1284 = vmul.f32 %v1251, %v1276
        %v1285 = vmul.f32 %v1252, %v1276
        %v1286 = vmul.f32 %v1253, %v1276
        %v1287 = vmul.f32 %v1254, %v1276
        %v1288 = vmul.f32 %v1255, %v1276
        %v1289 = vmul.f32 %v1256, %v1276
        %v1290 = vmul.f32 %v1257, %v1276
        %v1291 = vmul.f32 %v1258, %v1276
        %v1292 = vmul.f32 %v1259, %v1276
        %v1293 = vmul.f32 %v1260, %v1276
        %v1294 = vmul.f32 %v1261, %v1276
        %v1295 = vmul.f32 %v1262, %v1276
        %v1296 = vmul.f32 %v1263, %v1276
        %v1297 = vmul.f32 %v1264, %v1276
        %v1298 = vmul.f32 %v1265, %v1276
        %v1299 = vmul.f32 %v1266, %v1276
        %v1300 = vmul.f32 %v1267, %v1276
        %v1301 = vmul.f32 %v1268, %v1276
        %v1302 = vmul.f32 %v1269, %v1276
        %v1303 = vmul.f32 %v1270, %v1276
        %v1304 = vmul.f32 %v1271, %v1276
        %v1305 = vmul.f32 %v1272, %v1276
        %v1306 = vmul.f32 %v1273, %v1276
        %v1307 = vmul.f32 %v1274, %v1276
        %v1308 = vmul.f32 %v1275, %v1276
        %v1309 = vperm.slane %v183, 5
        %v1310 = vadd.f32 %v1277, %v1309
        %v1311 = vadd.f32 %v1278, %v1309
        %v1312 = vadd.f32 %v1279, %v1309
        %v1313 = vadd.f32 %v1280, %v1309
        %v1314 = vadd.f32 %v1281, %v1309
        %v1315 = vadd.f32 %v1282, %v1309
        %v1316 = vadd.f32 %v1283, %v1309
        %v1317 = vadd.f32 %v1284, %v1309
        %v1318 = vadd.f32 %v1285, %v1309
        %v1319 = vadd.f32 %v1286, %v1309
        %v1320 = vadd.f32 %v1287, %v1309
        %v1321 = vadd.f32 %v1288, %v1309
        %v1322 = vadd.f32 %v1289, %v1309
        %v1323 = vadd.f32 %v1290, %v1309
        %v1324 = vadd.f32 %v1291, %v1309
        %v1325 = vadd.f32 %v1292, %v1309
        %v1326 = vadd.f32 %v1293, %v1309
        %v1327 = vadd.f32 %v1294, %v1309
        %v1328 = vadd.f32 %v1295, %v1309
        %v1329 = vadd.f32 %v1296, %v1309
        %v1330 = vadd.f32 %v1297, %v1309
        %v1331 = vadd.f32 %v1298, %v1309
        %v1332 = vadd.f32 %v1299, %v1309
        %v1333 = vadd.f32 %v1300, %v1309
        %v1334 = vadd.f32 %v1301, %v1309
        %v1335 = vadd.f32 %v1302, %v1309
        %v1336 = vadd.f32 %v1303, %v1309
        %v1337 = vadd.f32 %v1304, %v1309
        %v1338 = vadd.f32 %v1305, %v1309
        %v1339 = vadd.f32 %v1306, %v1309
        %v1340 = vadd.f32 %v1307, %v1309
        %v1341 = vadd.f32 %v1308, %v1309
        %1342 = vst [vmem:[%s261 + $0x8] sm:$0xff] %v1310
        %1343 = vst [vmem:[%s261 + $0x10] sm:$0xff] %v1311
        %1344 = vst [vmem:[%s261 + $0x28] sm:$0xff] %v1312
        %1345 = vst [vmem:[%s261 + $0x30] sm:$0xff] %v1313
        %1346 = vst [vmem:[%s261 + $0x48] sm:$0xff] %v1314
        %1347 = vst [vmem:[%s261 + $0x50] sm:$0xff] %v1315
        %1348 = vst [vmem:[%s261 + $0x68] sm:$0xff] %v1316
        %1349 = vst [vmem:[%s261 + $0x70] sm:$0xff] %v1317
        %1350 = vst [vmem:[%s261 + $0x88] sm:$0xff] %v1318
        %1351 = vst [vmem:[%s261 + $0x90] sm:$0xff] %v1319
        %1352 = vst [vmem:[%s261 + $0xa8] sm:$0xff] %v1320
        %1353 = vst [vmem:[%s261 + $0xb0] sm:$0xff] %v1321
        %1354 = vst [vmem:[%s261 + $0xc8] sm:$0xff] %v1322
        %1355 = vst [vmem:[%s261 + $0xd0] sm:$0xff] %v1323
        %1356 = vst [vmem:[%s261 + $0xe8] sm:$0xff] %v1324
        %1357 = vst [vmem:[%s261 + $0xf0] sm:$0xff] %v1325
        %1358 = vst [vmem:[%s261 + $0x108] sm:$0xff] %v1326
        %1359 = vst [vmem:[%s261 + $0x110] sm:$0xff] %v1327
        %1360 = vst [vmem:[%s261 + $0x128] sm:$0xff] %v1328
        %1361 = vst [vmem:[%s261 + $0x130] sm:$0xff] %v1329
        %1362 = vst [vmem:[%s261 + $0x148] sm:$0xff] %v1330
        %1363 = vst [vmem:[%s261 + $0x150] sm:$0xff] %v1331
        %1364 = vst [vmem:[%s261 + $0x168] sm:$0xff] %v1332
        %1365 = vst [vmem:[%s261 + $0x170] sm:$0xff] %v1333
        %1366 = vst [vmem:[%s261 + $0x188] sm:$0xff] %v1334
        %1367 = vst [vmem:[%s261 + $0x190] sm:$0xff] %v1335
        %1368 = vst [vmem:[%s261 + $0x1a8] sm:$0xff] %v1336
        %1369 = vst [vmem:[%s261 + $0x1b0] sm:$0xff] %v1337
        %1370 = vst [vmem:[%s261 + $0x1c8] sm:$0xff] %v1338
        %1371 = vst [vmem:[%s261 + $0x1d0] sm:$0xff] %v1339
        %1372 = vst [vmem:[%s261 + $0x1e8] sm:$0xff] %v1340
        %1373 = vst [vmem:[%s261 + $0x1f0] sm:$0xff] %v1341
        %v1374 = vld [vmem:[#allocation2 + $0x7] sm:$0xff]
        %v1375 = vld [vmem:[#allocation2 + $0xf] sm:$0xff]
        %v1376 = vld [vmem:[#allocation2 + $0x27] sm:$0xff]
        %v1377 = vld [vmem:[#allocation2 + $0x2f] sm:$0xff]
        %v1378 = vld [vmem:[#allocation2 + $0x47] sm:$0xff]
        %v1379 = vld [vmem:[#allocation2 + $0x4f] sm:$0xff]
        %v1380 = vld [vmem:[#allocation2 + $0x67] sm:$0xff]
        %v1381 = vld [vmem:[#allocation2 + $0x6f] sm:$0xff]
        %v1382 = vld [vmem:[#allocation2 + $0x87] sm:$0xff]
        %v1383 = vld [vmem:[#allocation2 + $0x8f] sm:$0xff]
        %v1384 = vld [vmem:[#allocation2 + $0xa7] sm:$0xff]
        %v1385 = vld [vmem:[#allocation2 + $0xaf] sm:$0xff]
        %v1386 = vld [vmem:[#allocation2 + $0xc7] sm:$0xff]
        %v1387 = vld [vmem:[#allocation2 + $0xcf] sm:$0xff]
        %v1388 = vld [vmem:[#allocation2 + $0xe7] sm:$0xff]
        %v1389 = vld [vmem:[#allocation2 + $0xef] sm:$0xff]
        %v1390 = vld [vmem:[#allocation2 + $0x107] sm:$0xff]
        %v1391 = vld [vmem:[#allocation2 + $0x10f] sm:$0xff]
        %v1392 = vld [vmem:[#allocation2 + $0x127] sm:$0xff]
        %v1393 = vld [vmem:[#allocation2 + $0x12f] sm:$0xff]
        %v1394 = vld [vmem:[#allocation2 + $0x147] sm:$0xff]
        %v1395 = vld [vmem:[#allocation2 + $0x14f] sm:$0xff]
        %v1396 = vld [vmem:[#allocation2 + $0x167] sm:$0xff]
        %v1397 = vld [vmem:[#allocation2 + $0x16f] sm:$0xff]
        %v1398 = vld [vmem:[#allocation2 + $0x187] sm:$0xff]
        %v1399 = vld [vmem:[#allocation2 + $0x18f] sm:$0xff]
        %v1400 = vld [vmem:[#allocation2 + $0x1a7] sm:$0xff]
        %v1401 = vld [vmem:[#allocation2 + $0x1af] sm:$0xff]
        %v1402 = vld [vmem:[#allocation2 + $0x1c7] sm:$0xff]
        %v1403 = vld [vmem:[#allocation2 + $0x1cf] sm:$0xff]
        %v1404 = vld [vmem:[#allocation2 + $0x1e7] sm:$0xff]
        %v1405 = vld [vmem:[#allocation2 + $0x1ef] sm:$0xff]
        %v1406 = vld [vmem:[#allocation2 + $0x207] sm:$0xff]
        %v1407 = vld [vmem:[#allocation2 + $0x20f] sm:$0xff]
        %v1408 = vld [vmem:[#allocation2 + $0x227] sm:$0xff]
        %v1409 = vld [vmem:[#allocation2 + $0x22f] sm:$0xff]
        %v1410 = vperm.slane %v182, 1
        %v1411 = vmul.f32 %v1374, %v1410
        %v1412 = vmul.f32 %v1375, %v1410
        %v1413 = vmul.f32 %v1376, %v1410
        %v1414 = vmul.f32 %v1377, %v1410
        %v1415 = vmul.f32 %v1378, %v1410
        %v1416 = vmul.f32 %v1379, %v1410
        %v1417 = vmul.f32 %v1380, %v1410
        %v1418 = vmul.f32 %v1381, %v1410
        %v1419 = vmul.f32 %v1382, %v1410
        %v1420 = vmul.f32 %v1383, %v1410
        %v1421 = vmul.f32 %v1384, %v1410
        %v1422 = vmul.f32 %v1385, %v1410
        %v1423 = vmul.f32 %v1386, %v1410
        %v1424 = vmul.f32 %v1387, %v1410
        %v1425 = vmul.f32 %v1388, %v1410
        %v1426 = vmul.f32 %v1389, %v1410
        %v1427 = vmul.f32 %v1390, %v1410
        %v1428 = vmul.f32 %v1391, %v1410
        %v1429 = vmul.f32 %v1392, %v1410
        %v1430 = vmul.f32 %v1393, %v1410
        %v1431 = vmul.f32 %v1394, %v1410
        %v1432 = vmul.f32 %v1395, %v1410
        %v1433 = vmul.f32 %v1396, %v1410
        %v1434 = vmul.f32 %v1397, %v1410
        %v1435 = vmul.f32 %v1398, %v1410
        %v1436 = vmul.f32 %v1399, %v1410
        %v1437 = vmul.f32 %v1400, %v1410
        %v1438 = vmul.f32 %v1401, %v1410
        %v1439 = vmul.f32 %v1402, %v1410
        %v1440 = vmul.f32 %v1403, %v1410
        %v1441 = vmul.f32 %v1404, %v1410
        %v1442 = vmul.f32 %v1405, %v1410
        %v1443 = vperm.slane %v182, 4
        %v1444 = vmul.f32 %v1376, %v1443
        %v1445 = vmul.f32 %v1377, %v1443
        %v1446 = vmul.f32 %v1378, %v1443
        %v1447 = vmul.f32 %v1379, %v1443
        %v1448 = vmul.f32 %v1380, %v1443
        %v1449 = vmul.f32 %v1381, %v1443
        %v1450 = vmul.f32 %v1382, %v1443
        %v1451 = vmul.f32 %v1383, %v1443
        %v1452 = vmul.f32 %v1384, %v1443
        %v1453 = vmul.f32 %v1385, %v1443
        %v1454 = vmul.f32 %v1386, %v1443
        %v1455 = vmul.f32 %v1387, %v1443
        %v1456 = vmul.f32 %v1388, %v1443
        %v1457 = vmul.f32 %v1389, %v1443
        %v1458 = vmul.f32 %v1390, %v1443
        %v1459 = vmul.f32 %v1391, %v1443
        %v1460 = vmul.f32 %v1392, %v1443
        %v1461 = vmul.f32 %v1393, %v1443
        %v1462 = vmul.f32 %v1394, %v1443
        %v1463 = vmul.f32 %v1395, %v1443
        %v1464 = vmul.f32 %v1396, %v1443
        %v1465 = vmul.f32 %v1397, %v1443
        %v1466 = vmul.f32 %v1398, %v1443
        %v1467 = vmul.f32 %v1399, %v1443
        %v1468 = vmul.f32 %v1400, %v1443
        %v1469 = vmul.f32 %v1401, %v1443
        %v1470 = vmul.f32 %v1402, %v1443
        %v1471 = vmul.f32 %v1403, %v1443
        %v1472 = vmul.f32 %v1404, %v1443
        %v1473 = vmul.f32 %v1405, %v1443
        %v1474 = vmul.f32 %v1406, %v1443
        %v1475 = vmul.f32 %v1407, %v1443
        %v1476 = vadd.f32 %v1411, %v1444
        %v1477 = vadd.f32 %v1412, %v1445
        %v1478 = vadd.f32 %v1413, %v1446
        %v1479 = vadd.f32 %v1414, %v1447
        %v1480 = vadd.f32 %v1415, %v1448
        %v1481 = vadd.f32 %v1416, %v1449
        %v1482 = vadd.f32 %v1417, %v1450
        %v1483 = vadd.f32 %v1418, %v1451
        %v1484 = vadd.f32 %v1419, %v1452
        %v1485 = vadd.f32 %v1420, %v1453
        %v1486 = vadd.f32 %v1421, %v1454
        %v1487 = vadd.f32 %v1422, %v1455
        %v1488 = vadd.f32 %v1423, %v1456
        %v1489 = vadd.f32 %v1424, %v1457
        %v1490 = vadd.f32 %v1425, %v1458
        %v1491 = vadd.f32 %v1426, %v1459
        %v1492 = vadd.f32 %v1427, %v1460
        %v1493 = vadd.f32 %v1428, %v1461
        %v1494 = vadd.f32 %v1429, %v1462
        %v1495 = vadd.f32 %v1430, %v1463
        %v1496 = vadd.f32 %v1431, %v1464
        %v1497 = vadd.f32 %v1432, %v1465
        %v1498 = vadd.f32 %v1433, %v1466
        %v1499 = vadd.f32 %v1434, %v1467
        %v1500 = vadd.f32 %v1435, %v1468
        %v1501 = vadd.f32 %v1436, %v1469
        %v1502 = vadd.f32 %v1437, %v1470
        %v1503 = vadd.f32 %v1438, %v1471
        %v1504 = vadd.f32 %v1439, %v1472
        %v1505 = vadd.f32 %v1440, %v1473
        %v1506 = vadd.f32 %v1441, %v1474
        %v1507 = vadd.f32 %v1442, %v1475
        %v1508 = vperm.slane %v182, 7
        %v1509 = vmul.f32 %v1378, %v1508
        %v1510 = vmul.f32 %v1379, %v1508
        %v1511 = vmul.f32 %v1380, %v1508
        %v1512 = vmul.f32 %v1381, %v1508
        %v1513 = vmul.f32 %v1382, %v1508
        %v1514 = vmul.f32 %v1383, %v1508
        %v1515 = vmul.f32 %v1384, %v1508
        %v1516 = vmul.f32 %v1385, %v1508
        %v1517 = vmul.f32 %v1386, %v1508
        %v1518 = vmul.f32 %v1387, %v1508
        %v1519 = vmul.f32 %v1388, %v1508
        %v1520 = vmul.f32 %v1389, %v1508
        %v1521 = vmul.f32 %v1390, %v1508
        %v1522 = vmul.f32 %v1391, %v1508
        %v1523 = vmul.f32 %v1392, %v1508
        %v1524 = vmul.f32 %v1393, %v1508
        %v1525 = vmul.f32 %v1394, %v1508
        %v1526 = vmul.f32 %v1395, %v1508
        %v1527 = vmul.f32 %v1396, %v1508
        %v1528 = vmul.f32 %v1397, %v1508
        %v1529 = vmul.f32 %v1398, %v1508
        %v1530 = vmul.f32 %v1399, %v1508
        %v1531 = vmul.f32 %v1400, %v1508
        %v1532 = vmul.f32 %v1401, %v1508
        %v1533 = vmul.f32 %v1402, %v1508
        %v1534 = vmul.f32 %v1403, %v1508
        %v1535 = vmul.f32 %v1404, %v1508
        %v1536 = vmul.f32 %v1405, %v1508
        %v1537 = vmul.f32 %v1406, %v1508
        %v1538 = vmul.f32 %v1407, %v1508
        %v1539 = vmul.f32 %v1408, %v1508
        %v1540 = vmul.f32 %v1409, %v1508
        %v1541 = vadd.f32 %v1476, %v1509
        %v1542 = vadd.f32 %v1477, %v1510
        %v1543 = vadd.f32 %v1478, %v1511
        %v1544 = vadd.f32 %v1479, %v1512
        %v1545 = vadd.f32 %v1480, %v1513
        %v1546 = vadd.f32 %v1481, %v1514
        %v1547 = vadd.f32 %v1482, %v1515
        %v1548 = vadd.f32 %v1483, %v1516
        %v1549 = vadd.f32 %v1484, %v1517
        %v1550 = vadd.f32 %v1485, %v1518
        %v1551 = vadd.f32 %v1486, %v1519
        %v1552 = vadd.f32 %v1487, %v1520
        %v1553 = vadd.f32 %v1488, %v1521
        %v1554 = vadd.f32 %v1489, %v1522
        %v1555 = vadd.f32 %v1490, %v1523
        %v1556 = vadd.f32 %v1491, %v1524
        %v1557 = vadd.f32 %v1492, %v1525
        %v1558 = vadd.f32 %v1493, %v1526
        %v1559 = vadd.f32 %v1494, %v1527
        %v1560 = vadd.f32 %v1495, %v1528
        %v1561 = vadd.f32 %v1496, %v1529
        %v1562 = vadd.f32 %v1497, %v1530
        %v1563 = vadd.f32 %v1498, %v1531
        %v1564 = vadd.f32 %v1499, %v1532
        %v1565 = vadd.f32 %v1500, %v1533
        %v1566 = vadd.f32 %v1501, %v1534
        %v1567 = vadd.f32 %v1502, %v1535
        %v1568 = vadd.f32 %v1503, %v1536
        %v1569 = vadd.f32 %v1504, %v1537
        %v1570 = vadd.f32 %v1505, %v1538
        %v1571 = vadd.f32 %v1506, %v1539
        %v1572 = vadd.f32 %v1507, %v1540
        %v1573 = vld [vmem:[#allocation2 + $0x8] sm:$0xff]
        %v1574 = vld [vmem:[#allocation2 + $0x10] sm:$0xff]
        %v1575 = vld [vmem:[#allocation2 + $0x28] sm:$0xff]
        %v1576 = vld [vmem:[#allocation2 + $0x30] sm:$0xff]
        %v1577 = vld [vmem:[#allocation2 + $0x48] sm:$0xff]
        %v1578 = vld [vmem:[#allocation2 + $0x50] sm:$0xff]
        %v1579 = vld [vmem:[#allocation2 + $0x68] sm:$0xff]
        %v1580 = vld [vmem:[#allocation2 + $0x70] sm:$0xff]
        %v1581 = vld [vmem:[#allocation2 + $0x88] sm:$0xff]
        %v1582 = vld [vmem:[#allocation2 + $0x90] sm:$0xff]
        %v1583 = vld [vmem:[#allocation2 + $0xa8] sm:$0xff]
        %v1584 = vld [vmem:[#allocation2 + $0xb0] sm:$0xff]
        %v1585 = vld [vmem:[#allocation2 + $0xc8] sm:$0xff]
        %v1586 = vld [vmem:[#allocation2 + $0xd0] sm:$0xff]
        %v1587 = vld [vmem:[#allocation2 + $0xe8] sm:$0xff]
        %v1588 = vld [vmem:[#allocation2 + $0xf0] sm:$0xff]
        %v1589 = vld [vmem:[#allocation2 + $0x108] sm:$0xff]
        %v1590 = vld [vmem:[#allocation2 + $0x110] sm:$0xff]
        %v1591 = vld [vmem:[#allocation2 + $0x128] sm:$0xff]
        %v1592 = vld [vmem:[#allocation2 + $0x130] sm:$0xff]
        %v1593 = vld [vmem:[#allocation2 + $0x148] sm:$0xff]
        %v1594 = vld [vmem:[#allocation2 + $0x150] sm:$0xff]
        %v1595 = vld [vmem:[#allocation2 + $0x168] sm:$0xff]
        %v1596 = vld [vmem:[#allocation2 + $0x170] sm:$0xff]
        %v1597 = vld [vmem:[#allocation2 + $0x188] sm:$0xff]
        %v1598 = vld [vmem:[#allocation2 + $0x190] sm:$0xff]
        %v1599 = vld [vmem:[#allocation2 + $0x1a8] sm:$0xff]
        %v1600 = vld [vmem:[#allocation2 + $0x1b0] sm:$0xff]
        %v1601 = vld [vmem:[#allocation2 + $0x1c8] sm:$0xff]
        %v1602 = vld [vmem:[#allocation2 + $0x1d0] sm:$0xff]
        %v1603 = vld [vmem:[#allocation2 + $0x1e8] sm:$0xff]
        %v1604 = vld [vmem:[#allocation2 + $0x1f0] sm:$0xff]
        %v1605 = vld [vmem:[#allocation2 + $0x208] sm:$0xff]
        %v1606 = vld [vmem:[#allocation2 + $0x210] sm:$0xff]
        %v1607 = vld [vmem:[#allocation2 + $0x228] sm:$0xff]
        %v1608 = vld [vmem:[#allocation2 + $0x230] sm:$0xff]
        %v1609 = vperm.slane %v182, 2
        %v1610 = vmul.f32 %v1573, %v1609
        %v1611 = vmul.f32 %v1574, %v1609
        %v1612 = vmul.f32 %v1575, %v1609
        %v1613 = vmul.f32 %v1576, %v1609
        %v1614 = vmul.f32 %v1577, %v1609
        %v1615 = vmul.f32 %v1578, %v1609
        %v1616 = vmul.f32 %v1579, %v1609
        %v1617 = vmul.f32 %v1580, %v1609
        %v1618 = vmul.f32 %v1581, %v1609
        %v1619 = vmul.f32 %v1582, %v1609
        %v1620 = vmul.f32 %v1583, %v1609
        %v1621 = vmul.f32 %v1584, %v1609
        %v1622 = vmul.f32 %v1585, %v1609
        %v1623 = vmul.f32 %v1586, %v1609
        %v1624 = vmul.f32 %v1587, %v1609
        %v1625 = vmul.f32 %v1588, %v1609
        %v1626 = vmul.f32 %v1589, %v1609
        %v1627 = vmul.f32 %v1590, %v1609
        %v1628 = vmul.f32 %v1591, %v1609
        %v1629 = vmul.f32 %v1592, %v1609
        %v1630 = vmul.f32 %v1593, %v1609
        %v1631 = vmul.f32 %v1594, %v1609
        %v1632 = vmul.f32 %v1595, %v1609
        %v1633 = vmul.f32 %v1596, %v1609
        %v1634 = vmul.f32 %v1597, %v1609
        %v1635 = vmul.f32 %v1598, %v1609
        %v1636 = vmul.f32 %v1599, %v1609
        %v1637 = vmul.f32 %v1600, %v1609
        %v1638 = vmul.f32 %v1601, %v1609
        %v1639 = vmul.f32 %v1602, %v1609
        %v1640 = vmul.f32 %v1603, %v1609
        %v1641 = vmul.f32 %v1604, %v1609
        %v1642 = vadd.f32 %v1541, %v1610
        %v1643 = vadd.f32 %v1542, %v1611
        %v1644 = vadd.f32 %v1543, %v1612
        %v1645 = vadd.f32 %v1544, %v1613
        %v1646 = vadd.f32 %v1545, %v1614
        %v1647 = vadd.f32 %v1546, %v1615
        %v1648 = vadd.f32 %v1547, %v1616
        %v1649 = vadd.f32 %v1548, %v1617
        %v1650 = vadd.f32 %v1549, %v1618
        %v1651 = vadd.f32 %v1550, %v1619
        %v1652 = vadd.f32 %v1551, %v1620
        %v1653 = vadd.f32 %v1552, %v1621
        %v1654 = vadd.f32 %v1553, %v1622
        %v1655 = vadd.f32 %v1554, %v1623
        %v1656 = vadd.f32 %v1555, %v1624
        %v1657 = vadd.f32 %v1556, %v1625
        %v1658 = vadd.f32 %v1557, %v1626
        %v1659 = vadd.f32 %v1558, %v1627
        %v1660 = vadd.f32 %v1559, %v1628
        %v1661 = vadd.f32 %v1560, %v1629
        %v1662 = vadd.f32 %v1561, %v1630
        %v1663 = vadd.f32 %v1562, %v1631
        %v1664 = vadd.f32 %v1563, %v1632
        %v1665 = vadd.f32 %v1564, %v1633
        %v1666 = vadd.f32 %v1565, %v1634
        %v1667 = vadd.f32 %v1566, %v1635
        %v1668 = vadd.f32 %v1567, %v1636
        %v1669 = vadd.f32 %v1568, %v1637
        %v1670 = vadd.f32 %v1569, %v1638
        %v1671 = vadd.f32 %v1570, %v1639
        %v1672 = vadd.f32 %v1571, %v1640
        %v1673 = vadd.f32 %v1572, %v1641
        %v1674 = vperm.slane %v182, 5
        %v1675 = vmul.f32 %v1575, %v1674
        %v1676 = vmul.f32 %v1576, %v1674
        %v1677 = vmul.f32 %v1577, %v1674
        %v1678 = vmul.f32 %v1578, %v1674
        %v1679 = vmul.f32 %v1579, %v1674
        %v1680 = vmul.f32 %v1580, %v1674
        %v1681 = vmul.f32 %v1581, %v1674
        %v1682 = vmul.f32 %v1582, %v1674
        %v1683 = vmul.f32 %v1583, %v1674
        %v1684 = vmul.f32 %v1584, %v1674
        %v1685 = vmul.f32 %v1585, %v1674
        %v1686 = vmul.f32 %v1586, %v1674
        %v1687 = vmul.f32 %v1587, %v1674
        %v1688 = vmul.f32 %v1588, %v1674
        %v1689 = vmul.f32 %v1589, %v1674
        %v1690 = vmul.f32 %v1590, %v1674
        %v1691 = vmul.f32 %v1591, %v1674
        %v1692 = vmul.f32 %v1592, %v1674
        %v1693 = vmul.f32 %v1593, %v1674
        %v1694 = vmul.f32 %v1594, %v1674
        %v1695 = vmul.f32 %v1595, %v1674
        %v1696 = vmul.f32 %v1596, %v1674
        %v1697 = vmul.f32 %v1597, %v1674
        %v1698 = vmul.f32 %v1598, %v1674
        %v1699 = vmul.f32 %v1599, %v1674
        %v1700 = vmul.f32 %v1600, %v1674
        %v1701 = vmul.f32 %v1601, %v1674
        %v1702 = vmul.f32 %v1602, %v1674
        %v1703 = vmul.f32 %v1603, %v1674
        %v1704 = vmul.f32 %v1604, %v1674
        %v1705 = vmul.f32 %v1605, %v1674
        %v1706 = vmul.f32 %v1606, %v1674
        %v1707 = vadd.f32 %v1642, %v1675
        %v1708 = vadd.f32 %v1643, %v1676
        %v1709 = vadd.f32 %v1644, %v1677
        %v1710 = vadd.f32 %v1645, %v1678
        %v1711 = vadd.f32 %v1646, %v1679
        %v1712 = vadd.f32 %v1647, %v1680
        %v1713 = vadd.f32 %v1648, %v1681
        %v1714 = vadd.f32 %v1649, %v1682
        %v1715 = vadd.f32 %v1650, %v1683
        %v1716 = vadd.f32 %v1651, %v1684
        %v1717 = vadd.f32 %v1652, %v1685
        %v1718 = vadd.f32 %v1653, %v1686
        %v1719 = vadd.f32 %v1654, %v1687
        %v1720 = vadd.f32 %v1655, %v1688
        %v1721 = vadd.f32 %v1656, %v1689
        %v1722 = vadd.f32 %v1657, %v1690
        %v1723 = vadd.f32 %v1658, %v1691
        %v1724 = vadd.f32 %v1659, %v1692
        %v1725 = vadd.f32 %v1660, %v1693
        %v1726 = vadd.f32 %v1661, %v1694
        %v1727 = vadd.f32 %v1662, %v1695
        %v1728 = vadd.f32 %v1663, %v1696
        %v1729 = vadd.f32 %v1664, %v1697
        %v1730 = vadd.f32 %v1665, %v1698
        %v1731 = vadd.f32 %v1666, %v1699
        %v1732 = vadd.f32 %v1667, %v1700
        %v1733 = vadd.f32 %v1668, %v1701
        %v1734 = vadd.f32 %v1669, %v1702
        %v1735 = vadd.f32 %v1670, %v1703
        %v1736 = vadd.f32 %v1671, %v1704
        %v1737 = vadd.f32 %v1672, %v1705
        %v1738 = vadd.f32 %v1673, %v1706
        %v1739 = vperm.slane %v183, 0
        %v1740 = vmul.f32 %v1577, %v1739
        %v1741 = vmul.f32 %v1578, %v1739
        %v1742 = vmul.f32 %v1579, %v1739
        %v1743 = vmul.f32 %v1580, %v1739
        %v1744 = vmul.f32 %v1581, %v1739
        %v1745 = vmul.f32 %v1582, %v1739
        %v1746 = vmul.f32 %v1583, %v1739
        %v1747 = vmul.f32 %v1584, %v1739
        %v1748 = vmul.f32 %v1585, %v1739
        %v1749 = vmul.f32 %v1586, %v1739
        %v1750 = vmul.f32 %v1587, %v1739
        %v1751 = vmul.f32 %v1588, %v1739
        %v1752 = vmul.f32 %v1589, %v1739
        %v1753 = vmul.f32 %v1590, %v1739
        %v1754 = vmul.f32 %v1591, %v1739
        %v1755 = vmul.f32 %v1592, %v1739
        %v1756 = vmul.f32 %v1593, %v1739
        %v1757 = vmul.f32 %v1594, %v1739
        %v1758 = vmul.f32 %v1595, %v1739
        %v1759 = vmul.f32 %v1596, %v1739
        %v1760 = vmul.f32 %v1597, %v1739
        %v1761 = vmul.f32 %v1598, %v1739
        %v1762 = vmul.f32 %v1599, %v1739
        %v1763 = vmul.f32 %v1600, %v1739
        %v1764 = vmul.f32 %v1601, %v1739
        %v1765 = vmul.f32 %v1602, %v1739
        %v1766 = vmul.f32 %v1603, %v1739
        %v1767 = vmul.f32 %v1604, %v1739
        %v1768 = vmul.f32 %v1605, %v1739
        %v1769 = vmul.f32 %v1606, %v1739
        %v1770 = vmul.f32 %v1607, %v1739
        %v1771 = vmul.f32 %v1608, %v1739
        %v1772 = vadd.f32 %v1707, %v1740
        %v1773 = vadd.f32 %v1708, %v1741
        %v1774 = vadd.f32 %v1709, %v1742
        %v1775 = vadd.f32 %v1710, %v1743
        %v1776 = vadd.f32 %v1711, %v1744
        %v1777 = vadd.f32 %v1712, %v1745
        %v1778 = vadd.f32 %v1713, %v1746
        %v1779 = vadd.f32 %v1714, %v1747
        %v1780 = vadd.f32 %v1715, %v1748
        %v1781 = vadd.f32 %v1716, %v1749
        %v1782 = vadd.f32 %v1717, %v1750
        %v1783 = vadd.f32 %v1718, %v1751
        %v1784 = vadd.f32 %v1719, %v1752
        %v1785 = vadd.f32 %v1720, %v1753
        %v1786 = vadd.f32 %v1721, %v1754
        %v1787 = vadd.f32 %v1722, %v1755
        %v1788 = vadd.f32 %v1723, %v1756
        %v1789 = vadd.f32 %v1724, %v1757
        %v1790 = vadd.f32 %v1725, %v1758
        %v1791 = vadd.f32 %v1726, %v1759
        %v1792 = vadd.f32 %v1727, %v1760
        %v1793 = vadd.f32 %v1728, %v1761
        %v1794 = vadd.f32 %v1729, %v1762
        %v1795 = vadd.f32 %v1730, %v1763
        %v1796 = vadd.f32 %v1731, %v1764
        %v1797 = vadd.f32 %v1732, %v1765
        %v1798 = vadd.f32 %v1733, %v1766
        %v1799 = vadd.f32 %v1734, %v1767
        %v1800 = vadd.f32 %v1735, %v1768
        %v1801 = vadd.f32 %v1736, %v1769
        %v1802 = vadd.f32 %v1737, %v1770
        %v1803 = vadd.f32 %v1738, %v1771
        %v1804 = vld [vmem:[#allocation2 + $0x9] sm:$0xff]
        %v1805 = vld [vmem:[#allocation2 + $0x11] sm:$0xff]
        %v1806 = vld [vmem:[#allocation2 + $0x29] sm:$0xff]
        %v1807 = vld [vmem:[#allocation2 + $0x31] sm:$0xff]
        %v1808 = vld [vmem:[#allocation2 + $0x49] sm:$0xff]
        %v1809 = vld [vmem:[#allocation2 + $0x51] sm:$0xff]
        %v1810 = vld [vmem:[#allocation2 + $0x69] sm:$0xff]
        %v1811 = vld [vmem:[#allocation2 + $0x71] sm:$0xff]
        %v1812 = vld [vmem:[#allocation2 + $0x89] sm:$0xff]
        %v1813 = vld [vmem:[#allocation2 + $0x91] sm:$0xff]
        %v1814 = vld [vmem:[#allocation2 + $0xa9] sm:$0xff]
        %v1815 = vld [vmem:[#allocation2 + $0xb1] sm:$0xff]
        %v1816 = vld [vmem:[#allocation2 + $0xc9] sm:$0xff]
        %v1817 = vld [vmem:[#allocation2 + $0xd1] sm:$0xff]
        %v1818 = vld [vmem:[#allocation2 + $0xe9] sm:$0xff]
        %v1819 = vld [vmem:[#allocation2 + $0xf1] sm:$0xff]
        %v1820 = vld [vmem:[#allocation2 + $0x109] sm:$0xff]
        %v1821 = vld [vmem:[#allocation2 + $0x111] sm:$0xff]
        %v1822 = vld [vmem:[#allocation2 + $0x129] sm:$0xff]
        %v1823 = vld [vmem:[#allocation2 + $0x131] sm:$0xff]
        %v1824 = vld [vmem:[#allocation2 + $0x149] sm:$0xff]
        %v1825 = vld [vmem:[#allocation2 + $0x151] sm:$0xff]
        %v1826 = vld [vmem:[#allocation2 + $0x169] sm:$0xff]
        %v1827 = vld [vmem:[#allocation2 + $0x171] sm:$0xff]
        %v1828 = vld [vmem:[#allocation2 + $0x189] sm:$0xff]
        %v1829 = vld [vmem:[#allocation2 + $0x191] sm:$0xff]
        %v1830 = vld [vmem:[#allocation2 + $0x1a9] sm:$0xff]
        %v1831 = vld [vmem:[#allocation2 + $0x1b1] sm:$0xff]
        %v1832 = vld [vmem:[#allocation2 + $0x1c9] sm:$0xff]
        %v1833 = vld [vmem:[#allocation2 + $0x1d1] sm:$0xff]
        %v1834 = vld [vmem:[#allocation2 + $0x1e9] sm:$0xff]
        %v1835 = vld [vmem:[#allocation2 + $0x1f1] sm:$0xff]
        %v1836 = vld [vmem:[#allocation2 + $0x209] sm:$0xff]
        %v1837 = vld [vmem:[#allocation2 + $0x211] sm:$0xff]
        %v1838 = vld [vmem:[#allocation2 + $0x229] sm:$0xff]
        %v1839 = vld [vmem:[#allocation2 + $0x231] sm:$0xff]
        %v1840 = vperm.slane %v182, 3
        %v1841 = vmul.f32 %v1804, %v1840
        %v1842 = vmul.f32 %v1805, %v1840
        %v1843 = vmul.f32 %v1806, %v1840
        %v1844 = vmul.f32 %v1807, %v1840
        %v1845 = vmul.f32 %v1808, %v1840
        %v1846 = vmul.f32 %v1809, %v1840
        %v1847 = vmul.f32 %v1810, %v1840
        %v1848 = vmul.f32 %v1811, %v1840
        %v1849 = vmul.f32 %v1812, %v1840
        %v1850 = vmul.f32 %v1813, %v1840
        %v1851 = vmul.f32 %v1814, %v1840
        %v1852 = vmul.f32 %v1815, %v1840
        %v1853 = vmul.f32 %v1816, %v1840
        %v1854 = vmul.f32 %v1817, %v1840
        %v1855 = vmul.f32 %v1818, %v1840
        %v1856 = vmul.f32 %v1819, %v1840
        %v1857 = vmul.f32 %v1820, %v1840
        %v1858 = vmul.f32 %v1821, %v1840
        %v1859 = vmul.f32 %v1822, %v1840
        %v1860 = vmul.f32 %v1823, %v1840
        %v1861 = vmul.f32 %v1824, %v1840
        %v1862 = vmul.f32 %v1825, %v1840
        %v1863 = vmul.f32 %v1826, %v1840
        %v1864 = vmul.f32 %v1827, %v1840
        %v1865 = vmul.f32 %v1828, %v1840
        %v1866 = vmul.f32 %v1829, %v1840
        %v1867 = vmul.f32 %v1830, %v1840
        %v1868 = vmul.f32 %v1831, %v1840
        %v1869 = vmul.f32 %v1832, %v1840
        %v1870 = vmul.f32 %v1833, %v1840
        %v1871 = vmul.f32 %v1834, %v1840
        %v1872 = vmul.f32 %v1835, %v1840
        %v1873 = vadd.f32 %v1772, %v1841
        %v1874 = vadd.f32 %v1773, %v1842
        %v1875 = vadd.f32 %v1774, %v1843
        %v1876 = vadd.f32 %v1775, %v1844
        %v1877 = vadd.f32 %v1776, %v1845
        %v1878 = vadd.f32 %v1777, %v1846
        %v1879 = vadd.f32 %v1778, %v1847
        %v1880 = vadd.f32 %v1779, %v1848
        %v1881 = vadd.f32 %v1780, %v1849
        %v1882 = vadd.f32 %v1781, %v1850
        %v1883 = vadd.f32 %v1782, %v1851
        %v1884 = vadd.f32 %v1783, %v1852
        %v1885 = vadd.f32 %v1784, %v1853
        %v1886 = vadd.f32 %v1785, %v1854
        %v1887 = vadd.f32 %v1786, %v1855
        %v1888 = vadd.f32 %v1787, %v1856
        %v1889 = vadd.f32 %v1788, %v1857
        %v1890 = vadd.f32 %v1789, %v1858
        %v1891 = vadd.f32 %v1790, %v1859
        %v1892 = vadd.f32 %v1791, %v1860
        %v1893 = vadd.f32 %v1792, %v1861
        %v1894 = vadd.f32 %v1793, %v1862
        %v1895 = vadd.f32 %v1794, %v1863
        %v1896 = vadd.f32 %v1795, %v1864
        %v1897 = vadd.f32 %v1796, %v1865
        %v1898 = vadd.f32 %v1797, %v1866
        %v1899 = vadd.f32 %v1798, %v1867
        %v1900 = vadd.f32 %v1799, %v1868
        %v1901 = vadd.f32 %v1800, %v1869
        %v1902 = vadd.f32 %v1801, %v1870
        %v1903 = vadd.f32 %v1802, %v1871
        %v1904 = vadd.f32 %v1803, %v1872
        %v1905 = vperm.slane %v182, 6
        %v1906 = vmul.f32 %v1806, %v1905
        %v1907 = vmul.f32 %v1807, %v1905
        %v1908 = vmul.f32 %v1808, %v1905
        %v1909 = vmul.f32 %v1809, %v1905
        %v1910 = vmul.f32 %v1810, %v1905
        %v1911 = vmul.f32 %v1811, %v1905
        %v1912 = vmul.f32 %v1812, %v1905
        %v1913 = vmul.f32 %v1813, %v1905
        %v1914 = vmul.f32 %v1814, %v1905
        %v1915 = vmul.f32 %v1815, %v1905
        %v1916 = vmul.f32 %v1816, %v1905
        %v1917 = vmul.f32 %v1817, %v1905
        %v1918 = vmul.f32 %v1818, %v1905
        %v1919 = vmul.f32 %v1819, %v1905
        %v1920 = vmul.f32 %v1820, %v1905
        %v1921 = vmul.f32 %v1821, %v1905
        %v1922 = vmul.f32 %v1822, %v1905
        %v1923 = vmul.f32 %v1823, %v1905
        %v1924 = vmul.f32 %v1824, %v1905
        %v1925 = vmul.f32 %v1825, %v1905
        %v1926 = vmul.f32 %v1826, %v1905
        %v1927 = vmul.f32 %v1827, %v1905
        %v1928 = vmul.f32 %v1828, %v1905
        %v1929 = vmul.f32 %v1829, %v1905
        %v1930 = vmul.f32 %v1830, %v1905
        %v1931 = vmul.f32 %v1831, %v1905
        %v1932 = vmul.f32 %v1832, %v1905
        %v1933 = vmul.f32 %v1833, %v1905
        %v1934 = vmul.f32 %v1834, %v1905
        %v1935 = vmul.f32 %v1835, %v1905
        %v1936 = vmul.f32 %v1836, %v1905
        %v1937 = vmul.f32 %v1837, %v1905
        %v1938 = vadd.f32 %v1873, %v1906
        %v1939 = vadd.f32 %v1874, %v1907
        %v1940 = vadd.f32 %v1875, %v1908
        %v1941 = vadd.f32 %v1876, %v1909
        %v1942 = vadd.f32 %v1877, %v1910
        %v1943 = vadd.f32 %v1878, %v1911
        %v1944 = vadd.f32 %v1879, %v1912
        %v1945 = vadd.f32 %v1880, %v1913
        %v1946 = vadd.f32 %v1881, %v1914
        %v1947 = vadd.f32 %v1882, %v1915
        %v1948 = vadd.f32 %v1883, %v1916
        %v1949 = vadd.f32 %v1884, %v1917
        %v1950 = vadd.f32 %v1885, %v1918
        %v1951 = vadd.f32 %v1886, %v1919
        %v1952 = vadd.f32 %v1887, %v1920
        %v1953 = vadd.f32 %v1888, %v1921
        %v1954 = vadd.f32 %v1889, %v1922
        %v1955 = vadd.f32 %v1890, %v1923
        %v1956 = vadd.f32 %v1891, %v1924
        %v1957 = vadd.f32 %v1892, %v1925
        %v1958 = vadd.f32 %v1893, %v1926
        %v1959 = vadd.f32 %v1894, %v1927
        %v1960 = vadd.f32 %v1895, %v1928
        %v1961 = vadd.f32 %v1896, %v1929
        %v1962 = vadd.f32 %v1897, %v1930
        %v1963 = vadd.f32 %v1898, %v1931
        %v1964 = vadd.f32 %v1899, %v1932
        %v1965 = vadd.f32 %v1900, %v1933
        %v1966 = vadd.f32 %v1901, %v1934
        %v1967 = vadd.f32 %v1902, %v1935
        %v1968 = vadd.f32 %v1903, %v1936
        %v1969 = vadd.f32 %v1904, %v1937
        %v1970 = vperm.slane %v183, 1
        %v1971 = vmul.f32 %v1808, %v1970
        %v1972 = vmul.f32 %v1809, %v1970
        %v1973 = vmul.f32 %v1810, %v1970
        %v1974 = vmul.f32 %v1811, %v1970
        %v1975 = vmul.f32 %v1812, %v1970
        %v1976 = vmul.f32 %v1813, %v1970
        %v1977 = vmul.f32 %v1814, %v1970
        %v1978 = vmul.f32 %v1815, %v1970
        %v1979 = vmul.f32 %v1816, %v1970
        %v1980 = vmul.f32 %v1817, %v1970
        %v1981 = vmul.f32 %v1818, %v1970
        %v1982 = vmul.f32 %v1819, %v1970
        %v1983 = vmul.f32 %v1820, %v1970
        %v1984 = vmul.f32 %v1821, %v1970
        %v1985 = vmul.f32 %v1822, %v1970
        %v1986 = vmul.f32 %v1823, %v1970
        %v1987 = vmul.f32 %v1824, %v1970
        %v1988 = vmul.f32 %v1825, %v1970
        %v1989 = vmul.f32 %v1826, %v1970
        %v1990 = vmul.f32 %v1827, %v1970
        %v1991 = vmul.f32 %v1828, %v1970
        %v1992 = vmul.f32 %v1829, %v1970
        %v1993 = vmul.f32 %v1830, %v1970
        %v1994 = vmul.f32 %v1831, %v1970
        %v1995 = vmul.f32 %v1832, %v1970
        %v1996 = vmul.f32 %v1833, %v1970
        %v1997 = vmul.f32 %v1834, %v1970
        %v1998 = vmul.f32 %v1835, %v1970
        %v1999 = vmul.f32 %v1836, %v1970
        %v2000 = vmul.f32 %v1837, %v1970
        %v2001 = vmul.f32 %v1838, %v1970
        %v2002 = vmul.f32 %v1839, %v1970
        %v2003 = vadd.f32 %v1938, %v1971
        %v2004 = vadd.f32 %v1939, %v1972
        %v2005 = vadd.f32 %v1940, %v1973
        %v2006 = vadd.f32 %v1941, %v1974
        %v2007 = vadd.f32 %v1942, %v1975
        %v2008 = vadd.f32 %v1943, %v1976
        %v2009 = vadd.f32 %v1944, %v1977
        %v2010 = vadd.f32 %v1945, %v1978
        %v2011 = vadd.f32 %v1946, %v1979
        %v2012 = vadd.f32 %v1947, %v1980
        %v2013 = vadd.f32 %v1948, %v1981
        %v2014 = vadd.f32 %v1949, %v1982
        %v2015 = vadd.f32 %v1950, %v1983
        %v2016 = vadd.f32 %v1951, %v1984
        %v2017 = vadd.f32 %v1952, %v1985
        %v2018 = vadd.f32 %v1953, %v1986
        %v2019 = vadd.f32 %v1954, %v1987
        %v2020 = vadd.f32 %v1955, %v1988
        %v2021 = vadd.f32 %v1956, %v1989
        %v2022 = vadd.f32 %v1957, %v1990
        %v2023 = vadd.f32 %v1958, %v1991
        %v2024 = vadd.f32 %v1959, %v1992
        %v2025 = vadd.f32 %v1960, %v1993
        %v2026 = vadd.f32 %v1961, %v1994
        %v2027 = vadd.f32 %v1962, %v1995
        %v2028 = vadd.f32 %v1963, %v1996
        %v2029 = vadd.f32 %v1964, %v1997
        %v2030 = vadd.f32 %v1965, %v1998
        %v2031 = vadd.f32 %v1966, %v1999
        %v2032 = vadd.f32 %v1967, %v2000
        %v2033 = vadd.f32 %v1968, %v2001
        %v2034 = vadd.f32 %v1969, %v2002
        %v2035 = vperm.slane %v183, 3
        %v2036 = vadd.f32 %v2003, %v2035
        %v2037 = vadd.f32 %v2004, %v2035
        %v2038 = vadd.f32 %v2005, %v2035
        %v2039 = vadd.f32 %v2006, %v2035
        %v2040 = vadd.f32 %v2007, %v2035
        %v2041 = vadd.f32 %v2008, %v2035
        %v2042 = vadd.f32 %v2009, %v2035
        %v2043 = vadd.f32 %v2010, %v2035
        %v2044 = vadd.f32 %v2011, %v2035
        %v2045 = vadd.f32 %v2012, %v2035
        %v2046 = vadd.f32 %v2013, %v2035
        %v2047 = vadd.f32 %v2014, %v2035
        %v2048 = vadd.f32 %v2015, %v2035
        %v2049 = vadd.f32 %v2016, %v2035
        %v2050 = vadd.f32 %v2017, %v2035
        %v2051 = vadd.f32 %v2018, %v2035
        %v2052 = vadd.f32 %v2019, %v2035
        %v2053 = vadd.f32 %v2020, %v2035
        %v2054 = vadd.f32 %v2021, %v2035
        %v2055 = vadd.f32 %v2022, %v2035
        %v2056 = vadd.f32 %v2023, %v2035
        %v2057 = vadd.f32 %v2024, %v2035
        %v2058 = vadd.f32 %v2025, %v2035
        %v2059 = vadd.f32 %v2026, %v2035
        %v2060 = vadd.f32 %v2027, %v2035
        %v2061 = vadd.f32 %v2028, %v2035
        %v2062 = vadd.f32 %v2029, %v2035
        %v2063 = vadd.f32 %v2030, %v2035
        %v2064 = vadd.f32 %v2031, %v2035
        %v2065 = vadd.f32 %v2032, %v2035
        %v2066 = vadd.f32 %v2033, %v2035
        %v2067 = vadd.f32 %v2034, %v2035
        %2068 = vst [vmem:[%s180] sm:$0xff] %v2036
        %2069 = vst [vmem:[%s180 + $0x8] sm:$0xff] %v2037
        %2070 = vst [vmem:[%s180 + $0x10] sm:$0xff] %v2038
        %2071 = vst [vmem:[%s180 + $0x18] sm:$0xff] %v2039
        %2072 = vst [vmem:[%s180 + $0x20] sm:$0xff] %v2040
        %2073 = vst [vmem:[%s180 + $0x28] sm:$0xff] %v2041
        %2074 = vst [vmem:[%s180 + $0x30] sm:$0xff] %v2042
        %2075 = vst [vmem:[%s180 + $0x38] sm:$0xff] %v2043
        %2076 = vst [vmem:[%s180 + $0x40] sm:$0xff] %v2044
        %2077 = vst [vmem:[%s180 + $0x48] sm:$0xff] %v2045
        %2078 = vst [vmem:[%s180 + $0x50] sm:$0xff] %v2046
        %2079 = vst [vmem:[%s180 + $0x58] sm:$0xff] %v2047
        %2080 = vst [vmem:[%s180 + $0x60] sm:$0xff] %v2048
        %2081 = vst [vmem:[%s180 + $0x68] sm:$0xff] %v2049
        %2082 = vst [vmem:[%s180 + $0x70] sm:$0xff] %v2050
        %2083 = vst [vmem:[%s180 + $0x78] sm:$0xff] %v2051
        %2084 = vst [vmem:[%s180 + $0x80] sm:$0xff] %v2052
        %2085 = vst [vmem:[%s180 + $0x88] sm:$0xff] %v2053
        %2086 = vst [vmem:[%s180 + $0x90] sm:$0xff] %v2054
        %2087 = vst [vmem:[%s180 + $0x98] sm:$0xff] %v2055
        %2088 = vst [vmem:[%s180 + $0xa0] sm:$0xff] %v2056
        %2089 = vst [vmem:[%s180 + $0xa8] sm:$0xff] %v2057
        %2090 = vst [vmem:[%s180 + $0xb0] sm:$0xff] %v2058
        %2091 = vst [vmem:[%s180 + $0xb8] sm:$0xff] %v2059
        %2092 = vst [vmem:[%s180 + $0xc0] sm:$0xff] %v2060
        %2093 = vst [vmem:[%s180 + $0xc8] sm:$0xff] %v2061
        %2094 = vst [vmem:[%s180 + $0xd0] sm:$0xff] %v2062
        %2095 = vst [vmem:[%s180 + $0xd8] sm:$0xff] %v2063
        %2096 = vst [vmem:[%s180 + $0xe0] sm:$0xff] %v2064
        %2097 = vst [vmem:[%s180 + $0xe8] sm:$0xff] %v2065
        %2098 = vst [vmem:[%s180 + $0xf0] sm:$0xff] %v2066
        %2099 = vst [vmem:[%s180 + $0xf8] sm:$0xff] %v2067
        %s2100 = sand.u32 %s75, 1
        %s2101 = scalar_lea.sflag [#allocation5], %s2100
        %s2102 = sand.u32 %s75, 1
        %s2103 = smul.addr %s2102, 256
        %s2104 = scalar_lea.vmem [#allocation8], %s2103
        // Predicated region
        $region37: #{tpu_custom_call.1} parent=27 // pred_check
          %p2105 = pneg %p85
        $region38: #{tpu_custom_call.1} parent=27 // pred_check_branch
          %2107 = sbr.rel (%p2105) target = $region40
        $region39: #{tpu_custom_call.1} parent=27 // pred_region
          %2109 = vsyncadd %s2101, 0
          %s2110 = smul.addr %s20, 32
          %s2111 = smul.addr %s2110, 8
          %s2112 = scalar_lea.hbm %s2, %s2111
          %s2113 = sshll.u32 %s2104, 4
          %s2114 = int_to_ptr.vmem [resolvable:$true] %s2113
          %s2115 = sshll.u32 %s2112, 4
          %s2116 = int_to_ptr.hbm [resolvable:$true] %s2115
          %2121 = dma.vmem_to_hbm [thread:$0]  %s2114, 4096, %s2116, %s2101, 128, 128, 8
        $region40: #{tpu_custom_call.1} parent=27 // pred_fallthru
          _
      $region28: #{tpu_custom_call.1} parent=5 // pred_fallthru
        _
      %p2122 = scmp.le.s32.totalorder 2, %s15
      // Predicated region
      $region41: #{tpu_custom_call.1} parent=5 // pred_check
        %p2123 = pneg %p2122
      $region42: #{tpu_custom_call.1} parent=5 // pred_check_branch
        %2125 = sbr.rel (%p2123) target = $region44
      $region43: #{tpu_custom_call.1} parent=5 // pred_region
        %s2126 = ssub.s32 %s15, 2
        // Predicated region
        $region45: #{tpu_custom_call.1} parent=43 // pred_check
          %p2127 = pneg %p91
        $region46: #{tpu_custom_call.1} parent=43 // pred_check_branch
          %2129 = sbr.rel (%p2127) target = $region48
        $region47: #{tpu_custom_call.1} parent=43 // pred_region
          %s2130 = sand.u32 %s76, 1
          %s2131 = scalar_lea.sflag [#allocation5], %s2130
          %s2132 = sand.u32 %s76, 1
          %s2133 = smul.addr %s2132, 256
          %s2134 = scalar_lea.vmem [#allocation8], %s2133
          %2136 = dma.done %s2131, 4096
        $region48: #{tpu_custom_call.1} parent=43 // pred_fallthru
          _
      $region44: #{tpu_custom_call.1} parent=5 // pred_fallthru
        _
    $region6: #{tpu_custom_call.1} parent=1 // loop_footer
      %s19 = sadd.s32 1, %s15
    $region7: #{tpu_custom_call.1} parent=1 // loop_footer_branch
      %14 = sbr.rel target = $region3
    $region8: #{tpu_custom_call.1} parent=1 // loop_exit
      _
    %2137 = vsyncpa [#allocation4], 1
    %s2138 = scalar_lea.sflag [#allocation4], 1
    %2139 = vsyncpa %s2138, 1
    %2140 = vsyncpa [#allocation7], 1
    %2141 = vsyncpa [#allocation5], 1
    %s2142 = scalar_lea.sflag [#allocation5], 1
    %2143 = vsyncpa %s2142, 1

</llo_original>
